<compile_context>
chip_gen: v7x
topology: tpu7x:2x2x1
jax: 0.10.0
libtpu: 0.0.40
codegen_flags: <defaults>
</compile_context>

<pallas_src>
import functools

import jax
import jax.numpy as jnp
from jax.experimental import pallas as pl
from jax.experimental.pallas import tpu as pltpu

# ----------------------- small Llama-like config -----------------------
VOCAB = 64
HIDDEN = 32
N_LAYERS = 2
N_HEADS = 4
HEAD_DIM = HIDDEN // N_HEADS          # 8
INTER = 64
EPS = 1e-6
ROPE_THETA = 10000.0
LOGITS_PAD = 128                      # lane-dense padded logits width


def _rmsnorm(x, w, eps):
    # f32 elementwise math (v5e has no bf16 VPU/EUP)
    var = jnp.mean(x * x, axis=-1, keepdims=True)
    return x * jax.lax.rsqrt(var + eps) * w


# ----------------------------- fused kernel -----------------------------
def _fused_forward_kernel(h_ref, cs_ref, norms_ref, wa_ref, wb_ref, lm_ref,
                          out_ref, *, batch, eps, scale):
    T, H = h_ref.shape                      # T = B*S
    S = T // batch
    D = HEAD_DIM
    NH = N_HEADS
    N = NH * T                              # head-stacked rows
    assert S & (S - 1) == 0, "S must be a power of two for the shift/and mask"
    s_bits = (S - 1).bit_length()

    x = h_ref[...]                          # (T, H) f32 activations
    cos_d = cs_ref[:, :D]                   # (T, D)
    sin_d = cs_ref[:, D:]
    # broadcast cos/sin across the head-stacked sublane axis (hoisted)
    cos_st = jnp.concatenate([cos_d] * NH, axis=0)      # (N, D)
    sin_st = jnp.concatenate([sin_d] * NH, axis=0)

    # Combined (head, batch)-block-diagonal AND causal mask, built once.
    # Stacked row index r = head*(B*S) + b*S + s  =>  r>>log2(S) = head*B + b,
    # r & (S-1) = s.  Reference passes attention_mask=None to the decoder
    # layers, so causal-only matches the spec (padding is not score-masked).
    rows = jax.lax.broadcasted_iota(jnp.int32, (N, N), 0)
    cols = jax.lax.broadcasted_iota(jnp.int32, (N, N), 1)
    same_blk = (rows >> s_bits) == (cols >> s_bits)
    causal = (cols & (S - 1)) <= (rows & (S - 1))
    mask = jnp.logical_and(same_blk, causal)
    neg = jnp.float32(-1e30)

    for l in range(N_LAYERS):
        wa = wa_ref[l]                      # (H, 5H + 2*INTER) bf16
        wb = wb_ref[l]                      # (H + INTER, H)    bf16

        # ---------------- self-attention ----------------
        normed = _rmsnorm(x, norms_ref[2 * l:2 * l + 1, :], eps)
        # one MXU push yields, per head, [q | k | v | q@R | k@R] (R = rotate_half
        # folded into the weight), laid out head-major along lanes.
        qkvx = jnp.dot(normed.astype(jnp.bfloat16), wa[:, :5 * H],
                       preferred_element_type=jnp.float32)          # (T, 5H)
        # head-stack along sublanes: (N, 5D)
        st = jnp.concatenate(
            [qkvx[:, hd * 5 * D:(hd + 1) * 5 * D] for hd in range(NH)], axis=0)
        q = st[:, 0:D] * cos_st + st[:, 3 * D:4 * D] * sin_st       # RoPE
        k = st[:, D:2 * D] * cos_st + st[:, 4 * D:5 * D] * sin_st
        v = st[:, 2 * D:3 * D]

        # ONE score matmul for all heads & batches, masked block-diag+causal
        s_mat = jax.lax.dot_general(
            q.astype(jnp.bfloat16), k.astype(jnp.bfloat16),
            (((1,), (1,)), ((), ())),
            preferred_element_type=jnp.float32) * scale              # (N, N)
        s_mat = jnp.where(mask, s_mat, neg)
        m = jnp.max(s_mat, axis=-1, keepdims=True)
        p = jnp.exp(s_mat - m)
        l_sum = jnp.sum(p, axis=-1, keepdims=True)
        # ONE PV matmul; fold the 1/l normalization into the (N, D) output
        o = jnp.dot(p.astype(jnp.bfloat16), v.astype(jnp.bfloat16),
                    preferred_element_type=jnp.float32) * (1.0 / l_sum)
        # un-stack heads back to (T, H)
        attn = jnp.concatenate(
            [o[hd * T:(hd + 1) * T, :] for hd in range(NH)], axis=1)
        x = x + jnp.dot(attn.astype(jnp.bfloat16), wb[:H, :],
                        preferred_element_type=jnp.float32)

        # ---------------- MLP (SwiGLU) ----------------
        normed2 = _rmsnorm(x, norms_ref[2 * l + 1:2 * l + 2, :], eps)
        gu = jnp.dot(normed2.astype(jnp.bfloat16), wa[:, 5 * H:],
                     preferred_element_type=jnp.float32)             # (T, 2*INTER)
        g = gu[:, :INTER]
        u = gu[:, INTER:]
        mlp = (g * jax.nn.sigmoid(g) * u).astype(jnp.bfloat16)
        x = x + jnp.dot(mlp, wb[H:, :], preferred_element_type=jnp.float32)

    # ------- last token only: final norm + lm_head (lane-dense (B,128)) -------
    x_last = jnp.concatenate(
        [x[b * S + S - 1: b * S + S, :] for b in range(batch)], axis=0)  # (B, H)
    hn = _rmsnorm(x_last, norms_ref[2 * N_LAYERS:2 * N_LAYERS + 1, :], eps)
    out_ref[...] = jnp.dot(hn.astype(jnp.bfloat16), lm_ref[...],
                           preferred_element_type=jnp.float32)        # (B, 128)


def fused_forward(h, cos, sin, params):
    """h: (B,S,H) f32; cos/sin: (B,S,HEAD_DIM). Returns last-token logits (B, VOCAB)."""
    B, S, H = h.shape
    x = h.reshape(B * S, H)
    cs = jnp.concatenate([cos, sin], axis=-1).reshape(B * S, 2 * HEAD_DIM)

    kernel = functools.partial(_fused_forward_kernel, batch=B, eps=EPS,
                               scale=1.0 / (HEAD_DIM ** 0.5))
    vmem = lambda: pl.BlockSpec(memory_space=pltpu.MemorySpace.VMEM)
    out = pl.pallas_call(
        kernel,
        out_shape=jax.ShapeDtypeStruct((B, LOGITS_PAD), jnp.float32),
        # no grid: the whole (tiny) model + activations live in VMEM for one shot
        in_specs=[vmem() for _ in range(6)],
        out_specs=vmem(),
    )(x, cs, params["norms"], params["wa"], params["wb"], params["lm_head"])
    return out[:, :VOCAB]                                             # (B, VOCAB)


# ------------------------------ JAX glue --------------------------------
def rope_cos_sin(position_ids, head_dim, theta=ROPE_THETA):
    inv_freq = 1.0 / (theta ** (jnp.arange(0, head_dim, 2, dtype=jnp.float32)
                                / head_dim))                          # (D/2,)
    freqs = position_ids.astype(jnp.float32)[..., None] * inv_freq    # (B, S, D/2)
    emb = jnp.concatenate([freqs, freqs], axis=-1)                    # (B, S, D)
    return jnp.cos(emb), jnp.sin(emb)


def llm_forward(params, input_ids, attention_mask, sample_key):
    B, S = input_ids.shape
    position_ids = jnp.cumsum(attention_mask.astype(jnp.int32), axis=-1) - 1
    position_ids = jnp.where(attention_mask == 0, 1, position_ids)

    # embedding gather stays in JAX (data-dependent row gather)
    h = params["embed"][input_ids]                                    # (B, S, H)
    cos, sin = rope_cos_sin(position_ids, HEAD_DIM)                   # (B, S, D)

    logits = fused_forward(h, cos, sin, params)                       # (B, V)
    probs = jax.nn.softmax(logits, axis=-1)

    # torch.multinomial(probs, 1) equivalent: inverse-CDF sampling
    u = jax.random.uniform(sample_key, (B, 1))
    cdf = jnp.cumsum(probs, axis=-1)
    next_tokens = jnp.argmax(cdf >= u * cdf[:, -1:], axis=-1).astype(input_ids.dtype)

    return jnp.concatenate([input_ids, next_tokens[:, None]], axis=-1)


# --------------------------- parameter init -----------------------------
def init_params(key):
    def nrm(k, shape, scale=0.05):
        return (scale * jax.random.normal(k, shape)).astype(jnp.float32)

    state = {"key": key}

    def nk():
        state["key"], sub = jax.random.split(state["key"])
        return sub

    half = HEAD_DIM // 2
    # R such that (q @ R) == rotate_half(q) for one head; block-diag over heads.
    r = jnp.zeros((HEAD_DIM, HEAD_DIM), jnp.float32)
    r = r.at[jnp.arange(half) + half, jnp.arange(half)].set(-1.0)
    r = r.at[jnp.arange(half), jnp.arange(half) + half].set(1.0)
    r_block = jnp.kron(jnp.eye(N_HEADS, dtype=jnp.float32), r)        # (H, H)

    embed = nrm(nk(), (VOCAB, HIDDEN))
    lm_head = nrm(nk(), (HIDDEN, VOCAB))
    lm_head_pad = jnp.pad(lm_head, ((0, 0), (0, LOGITS_PAD - VOCAB)))  # (H, 128)

    wa_layers, wb_layers = [], []
    for _ in range(N_LAYERS):
        wq = nrm(nk(), (HIDDEN, HIDDEN))
        wk = nrm(nk(), (HIDDEN, HIDDEN))
        wv = nrm(nk(), (HIDDEN, HIDDEN))
        wo = nrm(nk(), (HIDDEN, HIDDEN))
        w_gate = nrm(nk(), (HIDDEN, INTER))
        w_up = nrm(nk(), (HIDDEN, INTER))
        w_down = nrm(nk(), (INTER, HIDDEN))
        wq_r = wq @ r_block
        wk_r = wk @ r_block
        # head-major fused columns: per head [Wq | Wk | Wv | Wq@R | Wk@R]
        cols = []
        for hd in range(N_HEADS):
            sl = slice(hd * HEAD_DIM, (hd + 1) * HEAD_DIM)
            cols += [wq[:, sl], wk[:, sl], wv[:, sl], wq_r[:, sl], wk_r[:, sl]]
        wqkvx = jnp.concatenate(cols, axis=1)                         # (H, 5H)
        wgu = jnp.concatenate([w_gate, w_up], axis=1)                 # (H, 2*INTER)
        wa_layers.append(jnp.concatenate([wqkvx, wgu], axis=1))       # (H, 5H+2*INTER)
        wb_layers.append(jnp.concatenate([wo, w_down], axis=0))       # (H+INTER, H)

    return {
        "embed": embed,                                               # f32 (gather table)
        "lm_head": lm_head_pad.astype(jnp.bfloat16),                  # (H, 128)
        "norms": jnp.ones((2 * N_LAYERS + 1, HIDDEN), jnp.float32),   # ln_in/ln_post x L, final
        "wa": jnp.stack(wa_layers).astype(jnp.bfloat16),              # (L, H, 288)
        "wb": jnp.stack(wb_layers).astype(jnp.bfloat16),              # (L, 96, H)
    }


# -------------------------------- main -----------------------------------
if __name__ == "__main__":
    key = jax.random.PRNGKey(0)
    pkey, ikey, skey = jax.random.split(key, 3)

    B, S = 2, 8
    params = init_params(pkey)
    input_ids = jax.random.randint(ikey, (B, S), 0, VOCAB, dtype=jnp.int32)
    attention_mask = jnp.ones((B, S), dtype=jnp.int32)

    fwd = jax.jit(llm_forward)
    out = fwd(params, input_ids, attention_mask, skey)
    out = jax.block_until_ready(out)

    assert out.shape == (B, S + 1), out.shape
    print("KERNEL_OK")
</pallas_src>

<mosaic_0001>
module attributes {stable_mosaic.version = 11 : i64} {
  func.func @_fused_forward_kernel(%arg0: memref<16x32xf32, #tpu.memory_space<vmem>>, %arg1: memref<16x16xf32, #tpu.memory_space<vmem>>, %arg2: memref<5x32xf32, #tpu.memory_space<vmem>>, %arg3: memref<2x32x288xbf16, #tpu.memory_space<vmem>>, %arg4: memref<2x96x32xbf16, #tpu.memory_space<vmem>>, %arg5: memref<32x128xbf16, #tpu.memory_space<vmem>>, %arg6: memref<2x128xf32, #tpu.memory_space<vmem>>) attributes {dimension_semantics = [], scalar_prefetch = 0 : i64, scratch_operands = 0 : i64, tpu.core_type = #tpu.core_type<tc>} {
    %c0 = arith.constant 0 : index
    %c0_0 = arith.constant 0 : index
    %0 = vector.load %arg0[%c0, %c0_0] : memref<16x32xf32, #tpu.memory_space<vmem>>, vector<16x32xf32>
    %c0_1 = arith.constant 0 : index
    %c0_2 = arith.constant 0 : index
    %1 = vector.load %arg1[%c0_1, %c0_2] : memref<16x16xf32, #tpu.memory_space<vmem>>, vector<16x8xf32>
    %c0_3 = arith.constant 0 : index
    %c8 = arith.constant 8 : index
    %2 = vector.load %arg1[%c0_3, %c8] : memref<16x16xf32, #tpu.memory_space<vmem>>, vector<16x8xf32>
    %3 = tpu.concatenate %1, %1, %1, %1 in 0 : vector<16x8xf32>, vector<16x8xf32>, vector<16x8xf32>, vector<16x8xf32> -> vector<64x8xf32>
    %4 = tpu.concatenate %2, %2, %2, %2 in 0 : vector<16x8xf32>, vector<16x8xf32>, vector<16x8xf32>, vector<16x8xf32> -> vector<64x8xf32>
    %5 = tpu.iota {dimensions = array<i32: 0>} : vector<64x64xi32>
    %6 = tpu.iota {dimensions = array<i32: 1>} : vector<64x64xi32>
    %c3_i32 = arith.constant 3 : i32
    %7 = vector.broadcast %c3_i32 : i32 to vector<64x64xi32>
    %8 = arith.shrsi %5, %7 : vector<64x64xi32>
    %c3_i32_4 = arith.constant 3 : i32
    %9 = vector.broadcast %c3_i32_4 : i32 to vector<64x64xi32>
    %10 = arith.shrsi %6, %9 : vector<64x64xi32>
    %11 = arith.cmpi eq, %8, %10 : vector<64x64xi32>
    %c7_i32 = arith.constant 7 : i32
    %12 = vector.broadcast %c7_i32 : i32 to vector<64x64xi32>
    %13 = arith.andi %6, %12 : vector<64x64xi32>
    %c7_i32_5 = arith.constant 7 : i32
    %14 = vector.broadcast %c7_i32_5 : i32 to vector<64x64xi32>
    %15 = arith.andi %5, %14 : vector<64x64xi32>
    %16 = arith.cmpi sle, %13, %15 : vector<64x64xi32>
    %17 = arith.andi %11, %16 : vector<64x64xi1>
    %c0_6 = arith.constant 0 : index
    %c0_7 = arith.constant 0 : index
    %c0_8 = arith.constant 0 : index
    %18 = vector.load %arg3[%c0_6, %c0_7, %c0_8] : memref<2x32x288xbf16, #tpu.memory_space<vmem>>, vector<1x32x288xbf16>
    %19 = vector.shape_cast %18 : vector<1x32x288xbf16> to vector<32x288xbf16>
    %c0_9 = arith.constant 0 : index
    %c0_10 = arith.constant 0 : index
    %c0_11 = arith.constant 0 : index
    %20 = vector.load %arg4[%c0_9, %c0_10, %c0_11] : memref<2x96x32xbf16, #tpu.memory_space<vmem>>, vector<1x96x32xbf16>
    %21 = vector.shape_cast %20 : vector<1x96x32xbf16> to vector<96x32xbf16>
    %c0_12 = arith.constant 0 : index
    %c0_13 = arith.constant 0 : index
    %22 = vector.load %arg2[%c0_12, %c0_13] : memref<5x32xf32, #tpu.memory_space<vmem>>, vector<1x32xf32>
    %23 = arith.mulf %0, %0 : vector<16x32xf32>
    %cst = arith.constant dense<0.000000e+00> : vector<16xf32>
    %24 = vector.multi_reduction <add>, %23, %cst [1] : vector<16x32xf32> to vector<16xf32>
    %25 = vector.shape_cast %24 : vector<16xf32> to vector<16x1xf32>
    %cst_14 = arith.constant 3.200000e+01 : f32
    %26 = vector.broadcast %cst_14 : f32 to vector<16x1xf32>
    %27 = arith.divf %25, %26 : vector<16x1xf32>
    %cst_15 = arith.constant 9.99999997E-7 : f32
    %28 = vector.broadcast %cst_15 : f32 to vector<16x1xf32>
    %29 = arith.addf %27, %28 : vector<16x1xf32>
    %30 = math.rsqrt %29 : vector<16x1xf32>
    %31 = vector.broadcast %30 : vector<16x1xf32> to vector<16x32xf32>
    %32 = arith.mulf %0, %31 : vector<16x32xf32>
    %33 = vector.broadcast %22 : vector<1x32xf32> to vector<16x32xf32>
    %34 = arith.mulf %32, %33 : vector<16x32xf32>
    %35 = arith.truncf %34 : vector<16x32xf32> to vector<16x32xbf16>
    %36 = vector.extract_strided_slice %19 {offsets = [0, 0], sizes = [32, 160], strides = [1, 1]} : vector<32x288xbf16> to vector<32x160xbf16>
    %cst_16 = arith.constant dense<0.000000e+00> : vector<16x160xf32>
    %37 = tpu.matmul %35, %36, %cst_16 {dimension_numbers = #tpu.dot_dimension_numbers<[1], [0], [0], [1], [0, 0, 1, 1], [], []>} : vector<16x32xbf16>, vector<32x160xbf16>, vector<16x160xf32> -> vector<16x160xf32>
    %38 = vector.extract_strided_slice %37 {offsets = [0, 0], sizes = [16, 40], strides = [1, 1]} : vector<16x160xf32> to vector<16x40xf32>
    %39 = vector.extract_strided_slice %37 {offsets = [0, 40], sizes = [16, 40], strides = [1, 1]} : vector<16x160xf32> to vector<16x40xf32>
    %40 = vector.extract_strided_slice %37 {offsets = [0, 80], sizes = [16, 40], strides = [1, 1]} : vector<16x160xf32> to vector<16x40xf32>
    %41 = vector.extract_strided_slice %37 {offsets = [0, 120], sizes = [16, 40], strides = [1, 1]} : vector<16x160xf32> to vector<16x40xf32>
    %42 = tpu.concatenate %38, %39, %40, %41 in 0 : vector<16x40xf32>, vector<16x40xf32>, vector<16x40xf32>, vector<16x40xf32> -> vector<64x40xf32>
    %43 = vector.extract_strided_slice %42 {offsets = [0, 0], sizes = [64, 8], strides = [1, 1]} : vector<64x40xf32> to vector<64x8xf32>
    %44 = arith.mulf %43, %3 : vector<64x8xf32>
    %45 = vector.extract_strided_slice %42 {offsets = [0, 24], sizes = [64, 8], strides = [1, 1]} : vector<64x40xf32> to vector<64x8xf32>
    %46 = arith.mulf %45, %4 : vector<64x8xf32>
    %47 = arith.addf %44, %46 : vector<64x8xf32>
    %48 = vector.extract_strided_slice %42 {offsets = [0, 8], sizes = [64, 8], strides = [1, 1]} : vector<64x40xf32> to vector<64x8xf32>
    %49 = arith.mulf %48, %3 : vector<64x8xf32>
    %50 = vector.extract_strided_slice %42 {offsets = [0, 32], sizes = [64, 8], strides = [1, 1]} : vector<64x40xf32> to vector<64x8xf32>
    %51 = arith.mulf %50, %4 : vector<64x8xf32>
    %52 = arith.addf %49, %51 : vector<64x8xf32>
    %53 = vector.extract_strided_slice %42 {offsets = [0, 16], sizes = [64, 8], strides = [1, 1]} : vector<64x40xf32> to vector<64x8xf32>
    %54 = arith.truncf %47 : vector<64x8xf32> to vector<64x8xbf16>
    %55 = arith.truncf %52 : vector<64x8xf32> to vector<64x8xbf16>
    %cst_17 = arith.constant dense<0.000000e+00> : vector<64x64xf32>
    %56 = tpu.matmul %54, %55, %cst_17 {dimension_numbers = #tpu.dot_dimension_numbers<[1], [1], [0], [0], [0, 0, 1, 0], [], []>} : vector<64x8xbf16>, vector<64x8xbf16>, vector<64x64xf32> -> vector<64x64xf32>
    %cst_18 = arith.constant 0.353553385 : f32
    %57 = vector.broadcast %cst_18 : f32 to vector<64x64xf32>
    %58 = arith.mulf %56, %57 : vector<64x64xf32>
    %cst_19 = arith.constant -1.000000e+30 : f32
    %59 = vector.broadcast %cst_19 : f32 to vector<64x64xf32>
    %60 = arith.select %17, %58, %59 : vector<64x64xi1>, vector<64x64xf32>
    %cst_20 = arith.constant dense<0xFF800000> : vector<64xf32>
    %61 = vector.multi_reduction <maximumf>, %60, %cst_20 [1] : vector<64x64xf32> to vector<64xf32>
    %62 = vector.shape_cast %61 : vector<64xf32> to vector<64x1xf32>
    %63 = vector.broadcast %62 : vector<64x1xf32> to vector<64x64xf32>
    %64 = arith.subf %60, %63 : vector<64x64xf32>
    %65 = math.exp %64 : vector<64x64xf32>
    %cst_21 = arith.constant dense<0.000000e+00> : vector<64xf32>
    %66 = vector.multi_reduction <add>, %65, %cst_21 [1] : vector<64x64xf32> to vector<64xf32>
    %67 = vector.shape_cast %66 : vector<64xf32> to vector<64x1xf32>
    %68 = arith.truncf %65 : vector<64x64xf32> to vector<64x64xbf16>
    %69 = arith.truncf %53 : vector<64x8xf32> to vector<64x8xbf16>
    %cst_22 = arith.constant dense<0.000000e+00> : vector<64x8xf32>
    %70 = tpu.matmul %68, %69, %cst_22 {dimension_numbers = #tpu.dot_dimension_numbers<[1], [0], [0], [1], [0, 0, 1, 1], [], []>} : vector<64x64xbf16>, vector<64x8xbf16>, vector<64x8xf32> -> vector<64x8xf32>
    %cst_23 = arith.constant 1.000000e+00 : f32
    %71 = vector.broadcast %cst_23 : f32 to vector<64x1xf32>
    %72 = arith.divf %71, %67 : vector<64x1xf32>
    %73 = vector.broadcast %72 : vector<64x1xf32> to vector<64x8xf32>
    %74 = arith.mulf %70, %73 : vector<64x8xf32>
    %75 = vector.extract_strided_slice %74 {offsets = [0, 0], sizes = [16, 8], strides = [1, 1]} : vector<64x8xf32> to vector<16x8xf32>
    %76 = vector.extract_strided_slice %74 {offsets = [16, 0], sizes = [16, 8], strides = [1, 1]} : vector<64x8xf32> to vector<16x8xf32>
    %77 = vector.extract_strided_slice %74 {offsets = [32, 0], sizes = [16, 8], strides = [1, 1]} : vector<64x8xf32> to vector<16x8xf32>
    %78 = vector.extract_strided_slice %74 {offsets = [48, 0], sizes = [16, 8], strides = [1, 1]} : vector<64x8xf32> to vector<16x8xf32>
    %79 = tpu.concatenate %75, %76, %77, %78 in 1 : vector<16x8xf32>, vector<16x8xf32>, vector<16x8xf32>, vector<16x8xf32> -> vector<16x32xf32>
    %80 = arith.truncf %79 : vector<16x32xf32> to vector<16x32xbf16>
    %81 = vector.extract_strided_slice %21 {offsets = [0, 0], sizes = [32, 32], strides = [1, 1]} : vector<96x32xbf16> to vector<32x32xbf16>
    %cst_24 = arith.constant dense<0.000000e+00> : vector<16x32xf32>
    %82 = tpu.matmul %80, %81, %cst_24 {dimension_numbers = #tpu.dot_dimension_numbers<[1], [0], [0], [1], [0, 0, 1, 1], [], []>} : vector<16x32xbf16>, vector<32x32xbf16>, vector<16x32xf32> -> vector<16x32xf32>
    %83 = arith.addf %0, %82 : vector<16x32xf32>
    %c1 = arith.constant 1 : index
    %c0_25 = arith.constant 0 : index
    %84 = vector.load %arg2[%c1, %c0_25] : memref<5x32xf32, #tpu.memory_space<vmem>>, vector<1x32xf32>
    %85 = arith.mulf %83, %83 : vector<16x32xf32>
    %cst_26 = arith.constant dense<0.000000e+00> : vector<16xf32>
    %86 = vector.multi_reduction <add>, %85, %cst_26 [1] : vector<16x32xf32> to vector<16xf32>
    %87 = vector.shape_cast %86 : vector<16xf32> to vector<16x1xf32>
    %cst_27 = arith.constant 3.200000e+01 : f32
    %88 = vector.broadcast %cst_27 : f32 to vector<16x1xf32>
    %89 = arith.divf %87, %88 : vector<16x1xf32>
    %cst_28 = arith.constant 9.99999997E-7 : f32
    %90 = vector.broadcast %cst_28 : f32 to vector<16x1xf32>
    %91 = arith.addf %89, %90 : vector<16x1xf32>
    %92 = math.rsqrt %91 : vector<16x1xf32>
    %93 = vector.broadcast %92 : vector<16x1xf32> to vector<16x32xf32>
    %94 = arith.mulf %83, %93 : vector<16x32xf32>
    %95 = vector.broadcast %84 : vector<1x32xf32> to vector<16x32xf32>
    %96 = arith.mulf %94, %95 : vector<16x32xf32>
    %97 = arith.truncf %96 : vector<16x32xf32> to vector<16x32xbf16>
    %98 = vector.extract_strided_slice %19 {offsets = [0, 160], sizes = [32, 128], strides = [1, 1]} : vector<32x288xbf16> to vector<32x128xbf16>
    %cst_29 = arith.constant dense<0.000000e+00> : vector<16x128xf32>
    %99 = tpu.matmul %97, %98, %cst_29 {dimension_numbers = #tpu.dot_dimension_numbers<[1], [0], [0], [1], [0, 0, 1, 1], [], []>} : vector<16x32xbf16>, vector<32x128xbf16>, vector<16x128xf32> -> vector<16x128xf32>
    %100 = vector.extract_strided_slice %99 {offsets = [0, 0], sizes = [16, 64], strides = [1, 1]} : vector<16x128xf32> to vector<16x64xf32>
    %101 = vector.extract_strided_slice %99 {offsets = [0, 64], sizes = [16, 64], strides = [1, 1]} : vector<16x128xf32> to vector<16x64xf32>
    %102 = arith.negf %100 : vector<16x64xf32>
    %103 = math.exp %102 : vector<16x64xf32>
    %cst_30 = arith.constant 1.000000e+00 : f32
    %104 = vector.broadcast %cst_30 : f32 to vector<16x64xf32>
    %105 = arith.addf %104, %103 : vector<16x64xf32>
    %106 = arith.divf %104, %105 : vector<16x64xf32>
    %107 = arith.mulf %100, %106 : vector<16x64xf32>
    %108 = arith.mulf %107, %101 : vector<16x64xf32>
    %109 = arith.truncf %108 : vector<16x64xf32> to vector<16x64xbf16>
    %110 = vector.extract_strided_slice %21 {offsets = [32, 0], sizes = [64, 32], strides = [1, 1]} : vector<96x32xbf16> to vector<64x32xbf16>
    %cst_31 = arith.constant dense<0.000000e+00> : vector<16x32xf32>
    %111 = tpu.matmul %109, %110, %cst_31 {dimension_numbers = #tpu.dot_dimension_numbers<[1], [0], [0], [1], [0, 0, 1, 1], [], []>} : vector<16x64xbf16>, vector<64x32xbf16>, vector<16x32xf32> -> vector<16x32xf32>
    %112 = arith.addf %83, %111 : vector<16x32xf32>
    %c1_32 = arith.constant 1 : index
    %c0_33 = arith.constant 0 : index
    %c0_34 = arith.constant 0 : index
    %113 = vector.load %arg3[%c1_32, %c0_33, %c0_34] : memref<2x32x288xbf16, #tpu.memory_space<vmem>>, vector<1x32x288xbf16>
    %114 = vector.shape_cast %113 : vector<1x32x288xbf16> to vector<32x288xbf16>
    %c1_35 = arith.constant 1 : index
    %c0_36 = arith.constant 0 : index
    %c0_37 = arith.constant 0 : index
    %115 = vector.load %arg4[%c1_35, %c0_36, %c0_37] : memref<2x96x32xbf16, #tpu.memory_space<vmem>>, vector<1x96x32xbf16>
    %116 = vector.shape_cast %115 : vector<1x96x32xbf16> to vector<96x32xbf16>
    %c2 = arith.constant 2 : index
    %c0_38 = arith.constant 0 : index
    %117 = vector.load %arg2[%c2, %c0_38] : memref<5x32xf32, #tpu.memory_space<vmem>>, vector<1x32xf32>
    %118 = arith.mulf %112, %112 : vector<16x32xf32>
    %cst_39 = arith.constant dense<0.000000e+00> : vector<16xf32>
    %119 = vector.multi_reduction <add>, %118, %cst_39 [1] : vector<16x32xf32> to vector<16xf32>
    %120 = vector.shape_cast %119 : vector<16xf32> to vector<16x1xf32>
    %cst_40 = arith.constant 3.200000e+01 : f32
    %121 = vector.broadcast %cst_40 : f32 to vector<16x1xf32>
    %122 = arith.divf %120, %121 : vector<16x1xf32>
    %cst_41 = arith.constant 9.99999997E-7 : f32
    %123 = vector.broadcast %cst_41 : f32 to vector<16x1xf32>
    %124 = arith.addf %122, %123 : vector<16x1xf32>
    %125 = math.rsqrt %124 : vector<16x1xf32>
    %126 = vector.broadcast %125 : vector<16x1xf32> to vector<16x32xf32>
    %127 = arith.mulf %112, %126 : vector<16x32xf32>
    %128 = vector.broadcast %117 : vector<1x32xf32> to vector<16x32xf32>
    %129 = arith.mulf %127, %128 : vector<16x32xf32>
    %130 = arith.truncf %129 : vector<16x32xf32> to vector<16x32xbf16>
    %131 = vector.extract_strided_slice %114 {offsets = [0, 0], sizes = [32, 160], strides = [1, 1]} : vector<32x288xbf16> to vector<32x160xbf16>
    %cst_42 = arith.constant dense<0.000000e+00> : vector<16x160xf32>
    %132 = tpu.matmul %130, %131, %cst_42 {dimension_numbers = #tpu.dot_dimension_numbers<[1], [0], [0], [1], [0, 0, 1, 1], [], []>} : vector<16x32xbf16>, vector<32x160xbf16>, vector<16x160xf32> -> vector<16x160xf32>
    %133 = vector.extract_strided_slice %132 {offsets = [0, 0], sizes = [16, 40], strides = [1, 1]} : vector<16x160xf32> to vector<16x40xf32>
    %134 = vector.extract_strided_slice %132 {offsets = [0, 40], sizes = [16, 40], strides = [1, 1]} : vector<16x160xf32> to vector<16x40xf32>
    %135 = vector.extract_strided_slice %132 {offsets = [0, 80], sizes = [16, 40], strides = [1, 1]} : vector<16x160xf32> to vector<16x40xf32>
    %136 = vector.extract_strided_slice %132 {offsets = [0, 120], sizes = [16, 40], strides = [1, 1]} : vector<16x160xf32> to vector<16x40xf32>
    %137 = tpu.concatenate %133, %134, %135, %136 in 0 : vector<16x40xf32>, vector<16x40xf32>, vector<16x40xf32>, vector<16x40xf32> -> vector<64x40xf32>
    %138 = vector.extract_strided_slice %137 {offsets = [0, 0], sizes = [64, 8], strides = [1, 1]} : vector<64x40xf32> to vector<64x8xf32>
    %139 = arith.mulf %138, %3 : vector<64x8xf32>
    %140 = vector.extract_strided_slice %137 {offsets = [0, 24], sizes = [64, 8], strides = [1, 1]} : vector<64x40xf32> to vector<64x8xf32>
    %141 = arith.mulf %140, %4 : vector<64x8xf32>
    %142 = arith.addf %139, %141 : vector<64x8xf32>
    %143 = vector.extract_strided_slice %137 {offsets = [0, 8], sizes = [64, 8], strides = [1, 1]} : vector<64x40xf32> to vector<64x8xf32>
    %144 = arith.mulf %143, %3 : vector<64x8xf32>
    %145 = vector.extract_strided_slice %137 {offsets = [0, 32], sizes = [64, 8], strides = [1, 1]} : vector<64x40xf32> to vector<64x8xf32>
    %146 = arith.mulf %145, %4 : vector<64x8xf32>
    %147 = arith.addf %144, %146 : vector<64x8xf32>
    %148 = vector.extract_strided_slice %137 {offsets = [0, 16], sizes = [64, 8], strides = [1, 1]} : vector<64x40xf32> to vector<64x8xf32>
    %149 = arith.truncf %142 : vector<64x8xf32> to vector<64x8xbf16>
    %150 = arith.truncf %147 : vector<64x8xf32> to vector<64x8xbf16>
    %cst_43 = arith.constant dense<0.000000e+00> : vector<64x64xf32>
    %151 = tpu.matmul %149, %150, %cst_43 {dimension_numbers = #tpu.dot_dimension_numbers<[1], [1], [0], [0], [0, 0, 1, 0], [], []>} : vector<64x8xbf16>, vector<64x8xbf16>, vector<64x64xf32> -> vector<64x64xf32>
    %cst_44 = arith.constant 0.353553385 : f32
    %152 = vector.broadcast %cst_44 : f32 to vector<64x64xf32>
    %153 = arith.mulf %151, %152 : vector<64x64xf32>
    %cst_45 = arith.constant -1.000000e+30 : f32
    %154 = vector.broadcast %cst_45 : f32 to vector<64x64xf32>
    %155 = arith.select %17, %153, %154 : vector<64x64xi1>, vector<64x64xf32>
    %cst_46 = arith.constant dense<0xFF800000> : vector<64xf32>
    %156 = vector.multi_reduction <maximumf>, %155, %cst_46 [1] : vector<64x64xf32> to vector<64xf32>
    %157 = vector.shape_cast %156 : vector<64xf32> to vector<64x1xf32>
    %158 = vector.broadcast %157 : vector<64x1xf32> to vector<64x64xf32>
    %159 = arith.subf %155, %158 : vector<64x64xf32>
    %160 = math.exp %159 : vector<64x64xf32>
    %cst_47 = arith.constant dense<0.000000e+00> : vector<64xf32>
    %161 = vector.multi_reduction <add>, %160, %cst_47 [1] : vector<64x64xf32> to vector<64xf32>
    %162 = vector.shape_cast %161 : vector<64xf32> to vector<64x1xf32>
    %163 = arith.truncf %160 : vector<64x64xf32> to vector<64x64xbf16>
    %164 = arith.truncf %148 : vector<64x8xf32> to vector<64x8xbf16>
    %cst_48 = arith.constant dense<0.000000e+00> : vector<64x8xf32>
    %165 = tpu.matmul %163, %164, %cst_48 {dimension_numbers = #tpu.dot_dimension_numbers<[1], [0], [0], [1], [0, 0, 1, 1], [], []>} : vector<64x64xbf16>, vector<64x8xbf16>, vector<64x8xf32> -> vector<64x8xf32>
    %cst_49 = arith.constant 1.000000e+00 : f32
    %166 = vector.broadcast %cst_49 : f32 to vector<64x1xf32>
    %167 = arith.divf %166, %162 : vector<64x1xf32>
    %168 = vector.broadcast %167 : vector<64x1xf32> to vector<64x8xf32>
    %169 = arith.mulf %165, %168 : vector<64x8xf32>
    %170 = vector.extract_strided_slice %169 {offsets = [0, 0], sizes = [16, 8], strides = [1, 1]} : vector<64x8xf32> to vector<16x8xf32>
    %171 = vector.extract_strided_slice %169 {offsets = [16, 0], sizes = [16, 8], strides = [1, 1]} : vector<64x8xf32> to vector<16x8xf32>
    %172 = vector.extract_strided_slice %169 {offsets = [32, 0], sizes = [16, 8], strides = [1, 1]} : vector<64x8xf32> to vector<16x8xf32>
    %173 = vector.extract_strided_slice %169 {offsets = [48, 0], sizes = [16, 8], strides = [1, 1]} : vector<64x8xf32> to vector<16x8xf32>
    %174 = tpu.concatenate %170, %171, %172, %173 in 1 : vector<16x8xf32>, vector<16x8xf32>, vector<16x8xf32>, vector<16x8xf32> -> vector<16x32xf32>
    %175 = arith.truncf %174 : vector<16x32xf32> to vector<16x32xbf16>
    %176 = vector.extract_strided_slice %116 {offsets = [0, 0], sizes = [32, 32], strides = [1, 1]} : vector<96x32xbf16> to vector<32x32xbf16>
    %cst_50 = arith.constant dense<0.000000e+00> : vector<16x32xf32>
    %177 = tpu.matmul %175, %176, %cst_50 {dimension_numbers = #tpu.dot_dimension_numbers<[1], [0], [0], [1], [0, 0, 1, 1], [], []>} : vector<16x32xbf16>, vector<32x32xbf16>, vector<16x32xf32> -> vector<16x32xf32>
    %178 = arith.addf %112, %177 : vector<16x32xf32>
    %c3 = arith.constant 3 : index
    %c0_51 = arith.constant 0 : index
    %179 = vector.load %arg2[%c3, %c0_51] : memref<5x32xf32, #tpu.memory_space<vmem>>, vector<1x32xf32>
    %180 = arith.mulf %178, %178 : vector<16x32xf32>
    %cst_52 = arith.constant dense<0.000000e+00> : vector<16xf32>
    %181 = vector.multi_reduction <add>, %180, %cst_52 [1] : vector<16x32xf32> to vector<16xf32>
    %182 = vector.shape_cast %181 : vector<16xf32> to vector<16x1xf32>
    %cst_53 = arith.constant 3.200000e+01 : f32
    %183 = vector.broadcast %cst_53 : f32 to vector<16x1xf32>
    %184 = arith.divf %182, %183 : vector<16x1xf32>
    %cst_54 = arith.constant 9.99999997E-7 : f32
    %185 = vector.broadcast %cst_54 : f32 to vector<16x1xf32>
    %186 = arith.addf %184, %185 : vector<16x1xf32>
    %187 = math.rsqrt %186 : vector<16x1xf32>
    %188 = vector.broadcast %187 : vector<16x1xf32> to vector<16x32xf32>
    %189 = arith.mulf %178, %188 : vector<16x32xf32>
    %190 = vector.broadcast %179 : vector<1x32xf32> to vector<16x32xf32>
    %191 = arith.mulf %189, %190 : vector<16x32xf32>
    %192 = arith.truncf %191 : vector<16x32xf32> to vector<16x32xbf16>
    %193 = vector.extract_strided_slice %114 {offsets = [0, 160], sizes = [32, 128], strides = [1, 1]} : vector<32x288xbf16> to vector<32x128xbf16>
    %cst_55 = arith.constant dense<0.000000e+00> : vector<16x128xf32>
    %194 = tpu.matmul %192, %193, %cst_55 {dimension_numbers = #tpu.dot_dimension_numbers<[1], [0], [0], [1], [0, 0, 1, 1], [], []>} : vector<16x32xbf16>, vector<32x128xbf16>, vector<16x128xf32> -> vector<16x128xf32>
    %195 = vector.extract_strided_slice %194 {offsets = [0, 0], sizes = [16, 64], strides = [1, 1]} : vector<16x128xf32> to vector<16x64xf32>
    %196 = vector.extract_strided_slice %194 {offsets = [0, 64], sizes = [16, 64], strides = [1, 1]} : vector<16x128xf32> to vector<16x64xf32>
    %197 = arith.negf %195 : vector<16x64xf32>
    %198 = math.exp %197 : vector<16x64xf32>
    %cst_56 = arith.constant 1.000000e+00 : f32
    %199 = vector.broadcast %cst_56 : f32 to vector<16x64xf32>
    %200 = arith.addf %199, %198 : vector<16x64xf32>
    %201 = arith.divf %199, %200 : vector<16x64xf32>
    %202 = arith.mulf %195, %201 : vector<16x64xf32>
    %203 = arith.mulf %202, %196 : vector<16x64xf32>
    %204 = arith.truncf %203 : vector<16x64xf32> to vector<16x64xbf16>
    %205 = vector.extract_strided_slice %116 {offsets = [32, 0], sizes = [64, 32], strides = [1, 1]} : vector<96x32xbf16> to vector<64x32xbf16>
    %cst_57 = arith.constant dense<0.000000e+00> : vector<16x32xf32>
    %206 = tpu.matmul %204, %205, %cst_57 {dimension_numbers = #tpu.dot_dimension_numbers<[1], [0], [0], [1], [0, 0, 1, 1], [], []>} : vector<16x64xbf16>, vector<64x32xbf16>, vector<16x32xf32> -> vector<16x32xf32>
    %207 = arith.addf %178, %206 : vector<16x32xf32>
    %208 = vector.extract_strided_slice %207 {offsets = [7, 0], sizes = [1, 32], strides = [1, 1]} : vector<16x32xf32> to vector<1x32xf32>
    %209 = vector.extract_strided_slice %207 {offsets = [15, 0], sizes = [1, 32], strides = [1, 1]} : vector<16x32xf32> to vector<1x32xf32>
    %210 = tpu.concatenate %208, %209 in 0 : vector<1x32xf32>, vector<1x32xf32> -> vector<2x32xf32>
    %c4 = arith.constant 4 : index
    %c0_58 = arith.constant 0 : index
    %211 = vector.load %arg2[%c4, %c0_58] : memref<5x32xf32, #tpu.memory_space<vmem>>, vector<1x32xf32>
    %212 = arith.mulf %210, %210 : vector<2x32xf32>
    %cst_59 = arith.constant dense<0.000000e+00> : vector<2xf32>
    %213 = vector.multi_reduction <add>, %212, %cst_59 [1] : vector<2x32xf32> to vector<2xf32>
    %214 = vector.shape_cast %213 : vector<2xf32> to vector<2x1xf32>
    %cst_60 = arith.constant 3.200000e+01 : f32
    %215 = vector.broadcast %cst_60 : f32 to vector<2x1xf32>
    %216 = arith.divf %214, %215 : vector<2x1xf32>
    %cst_61 = arith.constant 9.99999997E-7 : f32
    %217 = vector.broadcast %cst_61 : f32 to vector<2x1xf32>
    %218 = arith.addf %216, %217 : vector<2x1xf32>
    %219 = math.rsqrt %218 : vector<2x1xf32>
    %220 = vector.broadcast %219 : vector<2x1xf32> to vector<2x32xf32>
    %221 = arith.mulf %210, %220 : vector<2x32xf32>
    %222 = vector.broadcast %211 : vector<1x32xf32> to vector<2x32xf32>
    %223 = arith.mulf %221, %222 : vector<2x32xf32>
    %224 = arith.truncf %223 : vector<2x32xf32> to vector<2x32xbf16>
    %c0_62 = arith.constant 0 : index
    %c0_63 = arith.constant 0 : index
    %225 = vector.load %arg5[%c0_62, %c0_63] : memref<32x128xbf16, #tpu.memory_space<vmem>>, vector<32x128xbf16>
    %cst_64 = arith.constant dense<0.000000e+00> : vector<2x128xf32>
    %226 = tpu.matmul %224, %225, %cst_64 {dimension_numbers = #tpu.dot_dimension_numbers<[1], [0], [0], [1], [0, 0, 1, 1], [], []>} : vector<2x32xbf16>, vector<32x128xbf16>, vector<2x128xf32> -> vector<2x128xf32>
    %c0_65 = arith.constant 0 : index
    %c0_66 = arith.constant 0 : index
    %227 = vector.load %arg6[%c0_65, %c0_66] : memref<2x128xf32, #tpu.memory_space<vmem>>, vector<2x128xf32>
    tpu.vector_store %arg6[%c0_65, %c0_66], %226 {strides = array<i32>} : memref<2x128xf32, #tpu.memory_space<vmem>>, vector<2x128xf32>,
    return
  }
}

</mosaic_0001>

<llo_original>
// kernel: llm_forward.1
$region0: #{llm_forward.1}
  #allocation0 [shape = 'u32[]', space=smem, size = 0x4, offset = 0x4, fixed_abs, tag = 'smem constant byte address 0x4 - core index']
  #allocation1 [shape = 'u32[144,128]{1,0:T(1,128)}', space=vmem, size = 0x12000, scoped, tag = 'internal scratch']
  %s0 = inlined_call_operand.vmem [shape: f32[16,32], index: 0, kind: input, shape index: {}]
  %s1 = inlined_call_operand.vmem [shape: f32[16,16], index: 1, kind: input, shape index: {}]
  %s2 = inlined_call_operand.vmem [shape: f32[5,32], index: 2, kind: input, shape index: {}]
  %s3 = inlined_call_operand.vmem [shape: bf16[2,32,288], index: 3, kind: input, shape index: {}]
  %s4 = inlined_call_operand.vmem [shape: bf16[2,96,32], index: 4, kind: input, shape index: {}]
  %s5 = inlined_call_operand.vmem [shape: bf16[32,128], index: 5, kind: input, shape index: {}]
  %s6 = inlined_call_operand.vmem [shape: f32[2,128], index: 6, kind: output, shape index: {}]
  %s7 = sld [smem:[#allocation0]]
  $region34: #{llm_forward.1} parent=0
    _
  %s9 = ssub.s32 1, %s7
  %s10 = scalar_select 0, %s9, %s7
  // Predicated region
  $region2: #{llm_forward.1} parent=0 // pred_check
    _
  $region3: #{llm_forward.1} parent=0 // pred_check_branch
    %12 = sbr.rel (0) target = $region5
  $region4: #{llm_forward.1} parent=0 // pred_region
    _
  $region5: #{llm_forward.1} parent=0 // pred_fallthru
    _
  // Predicated region
  $region6: #{llm_forward.1} parent=0 // pred_check
    _
  $region7: #{llm_forward.1} parent=0 // pred_check_branch
    %14 = sbr.rel (0) target = $region9
  $region8: #{llm_forward.1} parent=0 // pred_region
    _
  $region9: #{llm_forward.1} parent=0 // pred_fallthru
    _
  // Predicated region
  $region10: #{llm_forward.1} parent=0 // pred_check
    _
  $region11: #{llm_forward.1} parent=0 // pred_check_branch
    %16 = sbr.rel (0) target = $region13
  $region12: #{llm_forward.1} parent=0 // pred_region
    _
  $region13: #{llm_forward.1} parent=0 // pred_fallthru
    _
  // Predicated region
  $region14: #{llm_forward.1} parent=0 // pred_check
    _
  $region15: #{llm_forward.1} parent=0 // pred_check_branch
    %18 = sbr.rel (0) target = $region17
  $region16: #{llm_forward.1} parent=0 // pred_region
    _
  $region17: #{llm_forward.1} parent=0 // pred_fallthru
    _
  // Predicated region
  $region18: #{llm_forward.1} parent=0 // pred_check
    _
  $region19: #{llm_forward.1} parent=0 // pred_check_branch
    %20 = sbr.rel (0) target = $region21
  $region20: #{llm_forward.1} parent=0 // pred_region
    _
  $region21: #{llm_forward.1} parent=0 // pred_fallthru
    _
  // Predicated region
  $region22: #{llm_forward.1} parent=0 // pred_check
    _
  $region23: #{llm_forward.1} parent=0 // pred_check_branch
    %22 = sbr.rel (0) target = $region25
  $region24: #{llm_forward.1} parent=0 // pred_region
    _
  $region25: #{llm_forward.1} parent=0 // pred_fallthru
    _
  %v24 = vld [vmem:[%s0] sm:$0xff]
  %v25 = vld [vmem:[%s0 + $0x8] sm:$0xff]
  %v26 = vld [vmem:[%s1] sm:$0xff]
  %v27 = vld [vmem:[%s1 + $0x8] sm:$0xff]
  %v28 = vlaneseq
  %v29 = vshrl.u32 %v28, 7
  %v30 = vadd.s32 %v29, 8
  %v31 = vadd.s32 %v29, 16
  %v32 = vadd.s32 %v29, 24
  %v33 = vadd.s32 %v29, 32
  %v34 = vadd.s32 %v29, 40
  %v35 = vadd.s32 %v29, 48
  %v36 = vadd.s32 %v29, 56
  %v37 = vlaneseq
  %v38 = vand.u32 %v37, 127
  %v39 = vshra.s32 %v29, 3
  %v40 = vshra.s32 %v30, 3
  %v41 = vshra.s32 %v31, 3
  %v42 = vshra.s32 %v32, 3
  %v43 = vshra.s32 %v33, 3
  %v44 = vshra.s32 %v34, 3
  %v45 = vshra.s32 %v35, 3
  %v46 = vshra.s32 %v36, 3
  %v47 = vshra.s32 %v38, 3
  %vm48 = vcmp.eq.s32.totalorder %v39, %v47
  %vm49 = vcmp.eq.s32.totalorder %v40, %v47
  %vm50 = vcmp.eq.s32.totalorder %v41, %v47
  %vm51 = vcmp.eq.s32.totalorder %v42, %v47
  %vm52 = vcmp.eq.s32.totalorder %v43, %v47
  %vm53 = vcmp.eq.s32.totalorder %v44, %v47
  %vm54 = vcmp.eq.s32.totalorder %v45, %v47
  %vm55 = vcmp.eq.s32.totalorder %v46, %v47
  %v56 = vand.u32 %v38, 7
  %v57 = vand.u32 %v29, 7
  %v58 = vand.u32 %v30, 7
  %v59 = vand.u32 %v31, 7
  %v60 = vand.u32 %v32, 7
  %v61 = vand.u32 %v33, 7
  %v62 = vand.u32 %v34, 7
  %v63 = vand.u32 %v35, 7
  %v64 = vand.u32 %v36, 7
  %vm65 = vcmp.le.s32.totalorder %v56, %v57
  %vm66 = vcmp.le.s32.totalorder %v56, %v58
  %vm67 = vcmp.le.s32.totalorder %v56, %v59
  %vm68 = vcmp.le.s32.totalorder %v56, %v60
  %vm69 = vcmp.le.s32.totalorder %v56, %v61
  %vm70 = vcmp.le.s32.totalorder %v56, %v62
  %vm71 = vcmp.le.s32.totalorder %v56, %v63
  %vm72 = vcmp.le.s32.totalorder %v56, %v64
  %vm73 = vmand %vm48, %vm65
  %vm74 = vmand %vm49, %vm66
  %vm75 = vmand %vm50, %vm67
  %vm76 = vmand %vm51, %vm68
  %vm77 = vmand %vm52, %vm69
  %vm78 = vmand %vm53, %vm70
  %vm79 = vmand %vm54, %vm71
  %vm80 = vmand %vm55, %vm72
  %v81 = vld [vmem:[%s3] sm:$0xff]
  %v82 = vld [vmem:[%s3 + $0x8] sm:$0xf]
  %v83 = vld [vmem:[%s3 + $0xc] sm:$0xff]
  %v84 = vld [vmem:[%s3 + $0x14] sm:$0xf]
  %v85 = vld [vmem:[%s3 + $0x18] sm:$0xff]
  %v86 = vld [vmem:[%s3 + $0x20] sm:$0xf]
  %v87 = vld [vmem:[%s3 + $0x24] sm:$0xff]
  %v88 = vld [vmem:[%s3 + $0x2c] sm:$0xf]
  %v89 = vld [vmem:[%s4] sm:$0xf]
  %v90 = vld [vmem:[%s4 + $0x4] sm:$0xf]
  %v91 = vld [vmem:[%s4 + $0x8] sm:$0xf]
  %v92 = vld [vmem:[%s4 + $0xc] sm:$0xf]
  %v93 = vld [vmem:[%s4 + $0x10] sm:$0xf]
  %v94 = vld [vmem:[%s4 + $0x14] sm:$0xf]
  %v95 = vld [vmem:[%s4 + $0x18] sm:$0xf]
  %v96 = vld [vmem:[%s4 + $0x1c] sm:$0xf]
  %v97 = vld [vmem:[%s4 + $0x20] sm:$0xf]
  %v98 = vld [vmem:[%s4 + $0x24] sm:$0xf]
  %v99 = vld [vmem:[%s4 + $0x28] sm:$0xf]
  %v100 = vld [vmem:[%s4 + $0x2c] sm:$0xf]
  %v101 = vld [vmem:[%s2] sm:$0x1]
  %v102 = vmul.f32 %v24, %v24
  %v103 = vmul.f32 %v25, %v25
  %vm104 = vcmask 261120
  %v105 = vsel %vm104, %v102, 0.0
  %106 = vadd.xlane.f32.xlu0 %v105
  %v107 = vpop.xlane.xlu0 %106
  %v108 = vsel %vm104, %v103, 0.0
  %109 = vadd.xlane.f32.xlu0 %v108
  %v110 = vpop.xlane.xlu0 %109
  %v111 = vrcp.pop 32.0
  %v112 = vmul.f32 %v107, %v111
  %v113 = vmul.f32 %v110, %v111
  %v114 = vadd.f32 %v112, 1e-06
  %v115 = vadd.f32 %v113, 1e-06
  %v116 = vrsqrt.pop %v114
  %v117 = vrsqrt.pop %v115
  %v118 = vmul.f32 %v24, %v116
  %v119 = vmul.f32 %v25, %v117
  %v120 = vlaneseq
  %v121 = vshrl.u32 %v120, 7
  %v122 = vsub.s32 0, %v121
  %v123 = vrot.slane %v101, %v122
  %v124 = vmul.f32 %v118, %v123
  %v125 = vmul.f32 %v119, %v123
  %v126 = vpack.c.bf16 %v125, %v124
  %v131 = vunpack.c.l.b16 %v81
  %v132 = vunpack.c.h.b16 %v81
  %v133 = vunpack.c.l.b16 %v83
  %v134 = vunpack.c.h.b16 %v83
  %v135 = vunpack.c.l.b16 %v85
  %v136 = vunpack.c.h.b16 %v85
  %v137 = vunpack.c.l.b16 %v87
  %v138 = vunpack.c.h.b16 %v87
  %v139 = vpack.c.b16 %v133, %v131
  %v140 = vpack.c.b16 %v134, %v132
  %v141 = vpack.c.b16 %v137, %v135
  %v142 = vpack.c.b16 %v138, %v136
  %v148 = vsel %vm104, %v126, 0
  %150 = vmatprep.subr.bf16.mxu0 %v140
  %151 = vmatpush1.bf16.msra.mxu0 %v139
  %152 = vmatprep.subr.bf16.mxu0 %v142
  %153 = vmatpush1.bf16.msra.mxu0 %v141
  %154 = vmatprep.subr.bf16.mxu0 0
  %155 = vmatpush1.bf16.msra.mxu0 0
  %156 = vmatprep.subr.bf16.mxu0 0
  %157 = vmatpush1.bf16.msra.mxu0 0
  %158 = vmatprep.subr.bf16.mxu0 0
  %159 = vmatpush1.bf16.msra.mxu0 0
  %160 = vmatprep.subr.bf16.mxu0 0
  %161 = vmatpush1.bf16.msra.mxu0 0
  %162 = vmatprep.subr.bf16.mxu0 0
  %163 = vmatpush1.bf16.msra.mxu0 0
  %164 = vmatprep.subr.bf16.mxu0 0
  %165 = vmatpush1.bf16.msra.mxu0 0
  %166 = vmatprep.subr.bf16.mxu0 0
  %167 = vmatpush1.bf16.msra.mxu0 0
  %168 = vmatprep.subr.bf16.mxu0 0
  %169 = vmatpush1.bf16.msra.mxu0 0
  %170 = vmatprep.subr.bf16.mxu0 0
  %171 = vmatpush1.bf16.msra.mxu0 0
  %172 = vmatprep.subr.bf16.mxu0 0
  %173 = vmatpush1.bf16.msra.mxu0 0
  %174 = vmatprep.subr.bf16.mxu0 0
  %175 = vmatpush1.bf16.msra.mxu0 0
  %176 = vmatprep.subr.bf16.mxu0 0
  %177 = vmatpush1.bf16.msra.mxu0 0
  %178 = vmatprep.subr.bf16.mxu0 0
  %179 = vmatpush1.bf16.msra.mxu0 0
  %180 = vmatprep.subr.bf16.mxu0 0
  %181 = vmatpush1.bf16.msra.mxu0 0
  %182 = vmatprep.mubr.bf16.mxu0 0
  %183 = vmatmul.mubr.bf16.gmra.mrb[0].mxu0 %v148
  %v184 = vpop.f32.mrb[0].mxu0
  %v185 = vadd.f32 0.0, %v184
  %v186 = vpop.f32.mrb[0].mxu0
  %v187 = vadd.f32 0.0, %v186
  %v188 = vpop.f32.mrb[0].mxu0
  %v189 = vadd.f32 0.0, %v188
  %v190 = vpop.f32.mrb[0].mxu0
  %v191 = vadd.f32 0.0, %v190
  %192 = vdwg.mxu0
  %195 = vrot.lane.b32.xlu0 %v185, 88
  %v196 = vpop.permute.xlu0 %195
  %197 = vrot.lane.b32.xlu0 %v189, 88
  %v198 = vpop.permute.xlu0 %197
  %201 = vrot.lane.b32.xlu0 %v185, 48
  %v202 = vpop.permute.xlu0 %201
  %203 = vrot.lane.b32.xlu0 %v189, 48
  %v204 = vpop.permute.xlu0 %203
  %209 = vrot.lane.b32.xlu0 %v185, 8
  %v210 = vpop.permute.xlu0 %209
  %211 = vrot.lane.b32.xlu0 %v187, 8
  %v212 = vpop.permute.xlu0 %211
  %213 = vrot.lane.b32.xlu0 %v189, 8
  %v214 = vpop.permute.xlu0 %213
  %215 = vrot.lane.b32.xlu0 %v191, 8
  %v216 = vpop.permute.xlu0 %215
  %vm217 = vcmask 64512
  %v218 = vsel %vm217, %v210, %v212
  %v219 = vsel %vm217, %v214, %v216
  %v222 = vmul.f32 %v185, %v26
  %v223 = vmul.f32 %v189, %v27
  %v224 = vmul.f32 %v196, %v26
  %v225 = vmul.f32 %v198, %v27
  %v226 = vmul.f32 %v202, %v26
  %v227 = vmul.f32 %v204, %v27
  %v228 = vmul.f32 %v218, %v26
  %v229 = vmul.f32 %v219, %v27
  %232 = vrot.lane.b32.xlu0 %v26, 16
  %v233 = vpop.permute.xlu0 %232
  %234 = vrot.lane.b32.xlu0 %v27, 16
  %v235 = vpop.permute.xlu0 %234
  %v238 = vmul.f32 %v185, %v233
  %v239 = vmul.f32 %v189, %v235
  %v240 = vmul.f32 %v196, %v233
  %v241 = vmul.f32 %v198, %v235
  %v242 = vmul.f32 %v202, %v233
  %v243 = vmul.f32 %v204, %v235
  %v244 = vmul.f32 %v218, %v233
  %v245 = vmul.f32 %v219, %v235
  %254 = vrot.lane.b32.xlu0 %v238, 104
  %v255 = vpop.permute.xlu0 %254
  %256 = vrot.lane.b32.xlu0 %v239, 104
  %v257 = vpop.permute.xlu0 %256
  %258 = vrot.lane.b32.xlu0 %v240, 104
  %v259 = vpop.permute.xlu0 %258
  %260 = vrot.lane.b32.xlu0 %v241, 104
  %v261 = vpop.permute.xlu0 %260
  %262 = vrot.lane.b32.xlu0 %v242, 104
  %v263 = vpop.permute.xlu0 %262
  %264 = vrot.lane.b32.xlu0 %v243, 104
  %v265 = vpop.permute.xlu0 %264
  %266 = vrot.lane.b32.xlu0 %v244, 104
  %v267 = vpop.permute.xlu0 %266
  %268 = vrot.lane.b32.xlu0 %v245, 104
  %v269 = vpop.permute.xlu0 %268
  %v278 = vadd.f32 %v222, %v255
  %v279 = vadd.f32 %v223, %v257
  %v280 = vadd.f32 %v224, %v259
  %v281 = vadd.f32 %v225, %v261
  %v282 = vadd.f32 %v226, %v263
  %v283 = vadd.f32 %v227, %v265
  %v284 = vadd.f32 %v228, %v267
  %v285 = vadd.f32 %v229, %v269
  %286 = vrot.lane.b32.xlu0 %v26, 8
  %v287 = vpop.permute.xlu0 %286
  %288 = vrot.lane.b32.xlu0 %v27, 8
  %v289 = vpop.permute.xlu0 %288
  %v292 = vmul.f32 %v185, %v287
  %v293 = vmul.f32 %v189, %v289
  %v294 = vmul.f32 %v196, %v287
  %v295 = vmul.f32 %v198, %v289
  %v296 = vmul.f32 %v202, %v287
  %v297 = vmul.f32 %v204, %v289
  %v298 = vmul.f32 %v218, %v287
  %v299 = vmul.f32 %v219, %v289
  %300 = vrot.lane.b32.xlu0 %v26, 24
  %v301 = vpop.permute.xlu0 %300
  %302 = vrot.lane.b32.xlu0 %v27, 24
  %v303 = vpop.permute.xlu0 %302
  %v306 = vmul.f32 %v185, %v301
  %v307 = vmul.f32 %v189, %v303
  %v308 = vmul.f32 %v196, %v301
  %v309 = vmul.f32 %v198, %v303
  %v310 = vmul.f32 %v202, %v301
  %v311 = vmul.f32 %v204, %v303
  %v312 = vmul.f32 %v218, %v301
  %v313 = vmul.f32 %v219, %v303
  %322 = vrot.lane.b32.xlu0 %v306, 104
  %v323 = vpop.permute.xlu0 %322
  %324 = vrot.lane.b32.xlu0 %v307, 104
  %v325 = vpop.permute.xlu0 %324
  %326 = vrot.lane.b32.xlu0 %v308, 104
  %v327 = vpop.permute.xlu0 %326
  %328 = vrot.lane.b32.xlu0 %v309, 104
  %v329 = vpop.permute.xlu0 %328
  %330 = vrot.lane.b32.xlu0 %v310, 104
  %v331 = vpop.permute.xlu0 %330
  %332 = vrot.lane.b32.xlu0 %v311, 104
  %v333 = vpop.permute.xlu0 %332
  %334 = vrot.lane.b32.xlu0 %v312, 104
  %v335 = vpop.permute.xlu0 %334
  %336 = vrot.lane.b32.xlu0 %v313, 104
  %v337 = vpop.permute.xlu0 %336
  %v346 = vadd.f32 %v292, %v323
  %v347 = vadd.f32 %v293, %v325
  %v348 = vadd.f32 %v294, %v327
  %v349 = vadd.f32 %v295, %v329
  %v350 = vadd.f32 %v296, %v331
  %v351 = vadd.f32 %v297, %v333
  %v352 = vadd.f32 %v298, %v335
  %v353 = vadd.f32 %v299, %v337
  %v354 = vpack.c.bf16 %v279, %v278
  %v355 = vpack.c.bf16 %v281, %v280
  %v356 = vpack.c.bf16 %v283, %v282
  %v357 = vpack.c.bf16 %v285, %v284
  %v358 = vpack.c.bf16 %v347, %v346
  %v359 = vpack.c.bf16 %v349, %v348
  %v360 = vpack.c.bf16 %v351, %v350
  %v361 = vpack.c.bf16 %v353, %v352
  %366 = vrot.lane.b32.xlu0 %v358, 120
  %v367 = vpop.permute.xlu0 %366
  %368 = vrot.lane.b32.xlu0 %v359, 120
  %v369 = vpop.permute.xlu0 %368
  %370 = vrot.lane.b32.xlu0 %v360, 120
  %v371 = vpop.permute.xlu0 %370
  %372 = vrot.lane.b32.xlu0 %v361, 120
  %v373 = vpop.permute.xlu0 %372
  %v375 = vsel %vm217, %v354, 0
  %v378 = vsel %vm217, %v355, 0
  %v381 = vsel %vm217, %v356, 0
  %v384 = vsel %vm217, %v357, 0
  %v387 = vsel %vm217, %v367, 0
  %v390 = vsel %vm217, %v369, 0
  %v393 = vsel %vm217, %v371, 0
  %v396 = vsel %vm217, %v373, 0
  %398 = vmatprep.subr.bf16.mxu0 0
  %399 = vmatpush1.bf16.xpose.msra.mxu0 %v387
  %400 = vmatprep.subr.bf16.mxu0 0
  %401 = vmatpush1.bf16.xpose.msra.mxu0 %v390
  %402 = vmatprep.subr.bf16.mxu0 0
  %403 = vmatpush1.bf16.xpose.msra.mxu0 %v393
  %404 = vmatprep.subr.bf16.mxu0 0
  %405 = vmatpush1.bf16.xpose.msra.mxu0 %v396
  %406 = vmatprep.subr.bf16.mxu0 0
  %407 = vmatpush1.bf16.xpose.msra.mxu0 0
  %408 = vmatprep.subr.bf16.mxu0 0
  %409 = vmatpush1.bf16.xpose.msra.mxu0 0
  %410 = vmatprep.subr.bf16.mxu0 0
  %411 = vmatpush1.bf16.xpose.msra.mxu0 0
  %412 = vmatprep.subr.bf16.mxu0 0
  %413 = vmatpush1.bf16.xpose.msra.mxu0 0
  %414 = vmatprep.subr.bf16.mxu0 0
  %415 = vmatpush1.bf16.xpose.msra.mxu0 0
  %416 = vmatprep.subr.bf16.mxu0 0
  %417 = vmatpush1.bf16.xpose.msra.mxu0 0
  %418 = vmatprep.subr.bf16.mxu0 0
  %419 = vmatpush1.bf16.xpose.msra.mxu0 0
  %420 = vmatprep.subr.bf16.mxu0 0
  %421 = vmatpush1.bf16.xpose.msra.mxu0 0
  %422 = vmatprep.subr.bf16.mxu0 0
  %423 = vmatpush1.bf16.xpose.msra.mxu0 0
  %424 = vmatprep.subr.bf16.mxu0 0
  %425 = vmatpush1.bf16.xpose.msra.mxu0 0
  %426 = vmatprep.subr.bf16.mxu0 0
  %427 = vmatpush1.bf16.xpose.msra.mxu0 0
  %428 = vmatprep.subr.bf16.mxu0 0
  %429 = vmatpush1.bf16.xpose.msra.mxu0 0
  %430 = vmatprep.mubr.bf16.mxu0 0
  %431 = vmatmul.mubr.bf16.gmra.mrb[0].mxu0 %v375
  %v432 = vpop.f32.mrb[0].mxu0
  %v433 = vadd.f32 0.0, %v432
  %v434 = vpop.f32.mrb[0].mxu0
  %v435 = vpop.f32.mrb[0].mxu0
  %v436 = vadd.f32 0.0, %v435
  %v437 = vpop.f32.mrb[0].mxu0
  %438 = vmatprep.mubr.bf16.mxu0 0
  %439 = vmatmul.mubr.bf16.gmra.mrb[0].mxu0 %v378
  %v440 = vpop.f32.mrb[0].mxu0
  %v441 = vadd.f32 0.0, %v440
  %v442 = vpop.f32.mrb[0].mxu0
  %v443 = vpop.f32.mrb[0].mxu0
  %v444 = vadd.f32 0.0, %v443
  %v445 = vpop.f32.mrb[0].mxu0
  %446 = vmatprep.mubr.bf16.mxu0 0
  %447 = vmatmul.mubr.bf16.gmra.mrb[0].mxu0 %v381
  %v448 = vpop.f32.mrb[0].mxu0
  %v449 = vadd.f32 0.0, %v448
  %v450 = vpop.f32.mrb[0].mxu0
  %v451 = vpop.f32.mrb[0].mxu0
  %v452 = vadd.f32 0.0, %v451
  %v453 = vpop.f32.mrb[0].mxu0
  %454 = vmatprep.mubr.bf16.mxu0 0
  %455 = vmatmul.mubr.bf16.gmra.mrb[0].mxu0 %v384
  %v456 = vpop.f32.mrb[0].mxu0
  %v457 = vadd.f32 0.0, %v456
  %v458 = vpop.f32.mrb[0].mxu0
  %v459 = vpop.f32.mrb[0].mxu0
  %v460 = vadd.f32 0.0, %v459
  %v461 = vpop.f32.mrb[0].mxu0
  %462 = vdwg.mxu0
  %v463 = vmul.f32 %v433, 0.35355338
  %v464 = vmul.f32 %v436, 0.35355338
  %v465 = vmul.f32 %v441, 0.35355338
  %v466 = vmul.f32 %v444, 0.35355338
  %v467 = vmul.f32 %v449, 0.35355338
  %v468 = vmul.f32 %v452, 0.35355338
  %v469 = vmul.f32 %v457, 0.35355338
  %v470 = vmul.f32 %v460, 0.35355338
  %v471 = vsel %vm73, %v463, -1e+30
  %v472 = vsel %vm74, %v464, -1e+30
  %v473 = vsel %vm75, %v465, -1e+30
  %v474 = vsel %vm76, %v466, -1e+30
  %v475 = vsel %vm77, %v467, -1e+30
  %v476 = vsel %vm78, %v468, -1e+30
  %v477 = vsel %vm79, %v469, -1e+30
  %v478 = vsel %vm80, %v470, -1e+30
  %vm479 = vcmask 523264
  %v480 = vsel %vm479, %v471, -inf
  %481 = vmax.xlane.f32.xlu0 %v480
  %v482 = vpop.xlane.xlu0 %481
  %v483 = vsel %vm479, %v472, -inf
  %484 = vmax.xlane.f32.xlu0 %v483
  %v485 = vpop.xlane.xlu0 %484
  %v486 = vsel %vm479, %v473, -inf
  %487 = vmax.xlane.f32.xlu0 %v486
  %v488 = vpop.xlane.xlu0 %487
  %v489 = vsel %vm479, %v474, -inf
  %490 = vmax.xlane.f32.xlu0 %v489
  %v491 = vpop.xlane.xlu0 %490
  %v492 = vsel %vm479, %v475, -inf
  %493 = vmax.xlane.f32.xlu0 %v492
  %v494 = vpop.xlane.xlu0 %493
  %v495 = vsel %vm479, %v476, -inf
  %496 = vmax.xlane.f32.xlu0 %v495
  %v497 = vpop.xlane.xlu0 %496
  %v498 = vsel %vm479, %v477, -inf
  %499 = vmax.xlane.f32.xlu0 %v498
  %v500 = vpop.xlane.xlu0 %499
  %v501 = vsel %vm479, %v478, -inf
  %502 = vmax.xlane.f32.xlu0 %v501
  %v503 = vpop.xlane.xlu0 %502
  %v504 = vsub.f32 %v471, %v482
  %v505 = vsub.f32 %v472, %v485
  %v506 = vsub.f32 %v473, %v488
  %v507 = vsub.f32 %v474, %v491
  %v508 = vsub.f32 %v475, %v494
  %v509 = vsub.f32 %v476, %v497
  %v510 = vsub.f32 %v477, %v500
  %v511 = vsub.f32 %v478, %v503
  %v512 = vmul.f32 %v504, 1.442695
  %v513 = vpow.pop %v512
  %v514 = vmul.f32 %v505, 1.442695
  %v515 = vpow.pop %v514
  %v516 = vmul.f32 %v506, 1.442695
  %v517 = vpow.pop %v516
  %v518 = vmul.f32 %v507, 1.442695
  %v519 = vpow.pop %v518
  %v520 = vmul.f32 %v508, 1.442695
  %v521 = vpow.pop %v520
  %v522 = vmul.f32 %v509, 1.442695
  %v523 = vpow.pop %v522
  %v524 = vmul.f32 %v510, 1.442695
  %v525 = vpow.pop %v524
  %v526 = vmul.f32 %v511, 1.442695
  %v527 = vpow.pop %v526
  %v528 = vsel %vm479, %v513, 0.0
  %529 = vadd.xlane.f32.xlu0 %v528
  %v530 = vpop.xlane.xlu0 %529
  %v531 = vsel %vm479, %v515, 0.0
  %532 = vadd.xlane.f32.xlu0 %v531
  %v533 = vpop.xlane.xlu0 %532
  %v534 = vsel %vm479, %v517, 0.0
  %535 = vadd.xlane.f32.xlu0 %v534
  %v536 = vpop.xlane.xlu0 %535
  %v537 = vsel %vm479, %v519, 0.0
  %538 = vadd.xlane.f32.xlu0 %v537
  %v539 = vpop.xlane.xlu0 %538
  %v540 = vsel %vm479, %v521, 0.0
  %541 = vadd.xlane.f32.xlu0 %v540
  %v542 = vpop.xlane.xlu0 %541
  %v543 = vsel %vm479, %v523, 0.0
  %544 = vadd.xlane.f32.xlu0 %v543
  %v545 = vpop.xlane.xlu0 %544
  %v546 = vsel %vm479, %v525, 0.0
  %547 = vadd.xlane.f32.xlu0 %v546
  %v548 = vpop.xlane.xlu0 %547
  %v549 = vsel %vm479, %v527, 0.0
  %550 = vadd.xlane.f32.xlu0 %v549
  %v551 = vpop.xlane.xlu0 %550
  %v552 = vpack.c.bf16 %v515, %v513
  %v553 = vpack.c.bf16 %v519, %v517
  %v554 = vpack.c.bf16 %v523, %v521
  %v555 = vpack.c.bf16 %v527, %v525
  %v556 = vpack.c.bf16 %v189, %v185
  %v557 = vpack.c.bf16 %v198, %v196
  %v558 = vpack.c.bf16 %v204, %v202
  %v559 = vpack.c.bf16 %v219, %v218
  %564 = vrot.lane.b32.xlu0 %v556, 112
  %v565 = vpop.permute.xlu0 %564
  %566 = vrot.lane.b32.xlu0 %v557, 112
  %v567 = vpop.permute.xlu0 %566
  %568 = vrot.lane.b32.xlu0 %v558, 112
  %v569 = vpop.permute.xlu0 %568
  %570 = vrot.lane.b32.xlu0 %v559, 112
  %v571 = vpop.permute.xlu0 %570
  %v577 = vsel %vm479, %v552, 0
  %v580 = vsel %vm479, %v553, 0
  %v583 = vsel %vm479, %v554, 0
  %v586 = vsel %vm479, %v555, 0
  %588 = vmatprep.subr.bf16.mxu0 0
  %589 = vmatpush1.bf16.msra.mxu0 %v565
  %590 = vmatprep.subr.bf16.mxu0 0
  %591 = vmatpush1.bf16.msra.mxu0 %v567
  %592 = vmatprep.subr.bf16.mxu0 0
  %593 = vmatpush1.bf16.msra.mxu0 %v569
  %594 = vmatprep.subr.bf16.mxu0 0
  %595 = vmatpush1.bf16.msra.mxu0 %v571
  %596 = vmatprep.subr.bf16.mxu0 0
  %597 = vmatpush1.bf16.msra.mxu0 0
  %598 = vmatprep.subr.bf16.mxu0 0
  %599 = vmatpush1.bf16.msra.mxu0 0
  %600 = vmatprep.subr.bf16.mxu0 0
  %601 = vmatpush1.bf16.msra.mxu0 0
  %602 = vmatprep.subr.bf16.mxu0 0
  %603 = vmatpush1.bf16.msra.mxu0 0
  %604 = vmatprep.subr.bf16.mxu0 0
  %605 = vmatpush1.bf16.msra.mxu0 0
  %606 = vmatprep.subr.bf16.mxu0 0
  %607 = vmatpush1.bf16.msra.mxu0 0
  %608 = vmatprep.subr.bf16.mxu0 0
  %609 = vmatpush1.bf16.msra.mxu0 0
  %610 = vmatprep.subr.bf16.mxu0 0
  %611 = vmatpush1.bf16.msra.mxu0 0
  %612 = vmatprep.subr.bf16.mxu0 0
  %613 = vmatpush1.bf16.msra.mxu0 0
  %614 = vmatprep.subr.bf16.mxu0 0
  %615 = vmatpush1.bf16.msra.mxu0 0
  %616 = vmatprep.subr.bf16.mxu0 0
  %617 = vmatpush1.bf16.msra.mxu0 0
  %618 = vmatprep.subr.bf16.mxu0 0
  %619 = vmatpush1.bf16.msra.mxu0 0
  %620 = vmatprep.mubr.bf16.mxu0 0
  %621 = vmatmul.mubr.bf16.gmra.mrb[0].mxu0 %v577
  %v622 = vpop.f32.mrb[0].mxu0
  %v623 = vadd.f32 0.0, %v622
  %v624 = vpop.f32.mrb[0].mxu0
  %v625 = vpop.f32.mrb[0].mxu0
  %v626 = vadd.f32 0.0, %v625
  %v627 = vpop.f32.mrb[0].mxu0
  %628 = vmatprep.mubr.bf16.mxu0 0
  %629 = vmatmul.mubr.bf16.gmra.mrb[0].mxu0 %v580
  %v630 = vpop.f32.mrb[0].mxu0
  %v631 = vadd.f32 0.0, %v630
  %v632 = vpop.f32.mrb[0].mxu0
  %v633 = vpop.f32.mrb[0].mxu0
  %v634 = vadd.f32 0.0, %v633
  %v635 = vpop.f32.mrb[0].mxu0
  %636 = vmatprep.mubr.bf16.mxu0 0
  %637 = vmatmul.mubr.bf16.gmra.mrb[0].mxu0 %v583
  %v638 = vpop.f32.mrb[0].mxu0
  %v639 = vadd.f32 0.0, %v638
  %v640 = vpop.f32.mrb[0].mxu0
  %v641 = vpop.f32.mrb[0].mxu0
  %v642 = vadd.f32 0.0, %v641
  %v643 = vpop.f32.mrb[0].mxu0
  %644 = vmatprep.mubr.bf16.mxu0 0
  %645 = vmatmul.mubr.bf16.gmra.mrb[0].mxu0 %v586
  %v646 = vpop.f32.mrb[0].mxu0
  %v647 = vadd.f32 0.0, %v646
  %v648 = vpop.f32.mrb[0].mxu0
  %v649 = vpop.f32.mrb[0].mxu0
  %v650 = vadd.f32 0.0, %v649
  %v651 = vpop.f32.mrb[0].mxu0
  %652 = vdwg.mxu0
  %v653 = vrcp.pop %v530
  %v654 = vmul.f32 1.0, %v653
  %v655 = vrcp.pop %v533
  %v656 = vmul.f32 1.0, %v655
  %v657 = vrcp.pop %v536
  %v658 = vmul.f32 1.0, %v657
  %v659 = vrcp.pop %v539
  %v660 = vmul.f32 1.0, %v659
  %v661 = vrcp.pop %v542
  %v662 = vmul.f32 1.0, %v661
  %v663 = vrcp.pop %v545
  %v664 = vmul.f32 1.0, %v663
  %v665 = vrcp.pop %v548
  %v666 = vmul.f32 1.0, %v665
  %v667 = vrcp.pop %v551
  %v668 = vmul.f32 1.0, %v667
  %v669 = vmul.f32 %v623, %v654
  %v670 = vmul.f32 %v626, %v656
  %v671 = vmul.f32 %v631, %v658
  %v672 = vmul.f32 %v634, %v660
  %v673 = vmul.f32 %v639, %v662
  %v674 = vmul.f32 %v642, %v664
  %v675 = vmul.f32 %v647, %v666
  %v676 = vmul.f32 %v650, %v668
  %679 = vrot.lane.b32.xlu0 %v671, 8
  %v680 = vpop.permute.xlu0 %679
  %681 = vrot.lane.b32.xlu0 %v672, 8
  %v682 = vpop.permute.xlu0 %681
  %687 = vrot.lane.b32.xlu0 %v673, 16
  %v688 = vpop.permute.xlu0 %687
  %689 = vrot.lane.b32.xlu0 %v674, 16
  %v690 = vpop.permute.xlu0 %689
  %695 = vrot.lane.b32.xlu0 %v675, 24
  %v696 = vpop.permute.xlu0 %695
  %697 = vrot.lane.b32.xlu0 %v676, 24
  %v698 = vpop.permute.xlu0 %697
  %v701 = vsel %vm217, %v669, %v680
  %v702 = vsel %vm217, %v670, %v682
  %vm703 = vcmask 130048
  %v704 = vsel %vm703, %v701, %v688
  %v705 = vsel %vm703, %v702, %v690
  %vm706 = vcmask 195584
  %v707 = vsel %vm706, %v704, %v696
  %v708 = vsel %vm706, %v705, %v698
  %v709 = vpack.c.bf16 %v708, %v707
  %v714 = vunpack.c.l.b16 %v89
  %v715 = vunpack.c.l.b16 %v90
  %v716 = vunpack.c.l.b16 %v91
  %v717 = vunpack.c.l.b16 %v92
  %v718 = vpack.c.b16 %v715, %v714
  %v719 = vpack.c.b16 %v717, %v716
  %v723 = vsel %vm104, %v709, 0
  %725 = vmatprep.subr.bf16.mxu0 0
  %726 = vmatpush1.bf16.msra.mxu0 %v718
  %727 = vmatprep.subr.bf16.mxu0 0
  %728 = vmatpush1.bf16.msra.mxu0 %v719
  %729 = vmatprep.subr.bf16.mxu0 0
  %730 = vmatpush1.bf16.msra.mxu0 0
  %731 = vmatprep.subr.bf16.mxu0 0
  %732 = vmatpush1.bf16.msra.mxu0 0
  %733 = vmatprep.subr.bf16.mxu0 0
  %734 = vmatpush1.bf16.msra.mxu0 0
  %735 = vmatprep.subr.bf16.mxu0 0
  %736 = vmatpush1.bf16.msra.mxu0 0
  %737 = vmatprep.subr.bf16.mxu0 0
  %738 = vmatpush1.bf16.msra.mxu0 0
  %739 = vmatprep.subr.bf16.mxu0 0
  %740 = vmatpush1.bf16.msra.mxu0 0
  %741 = vmatprep.subr.bf16.mxu0 0
  %742 = vmatpush1.bf16.msra.mxu0 0
  %743 = vmatprep.subr.bf16.mxu0 0
  %744 = vmatpush1.bf16.msra.mxu0 0
  %745 = vmatprep.subr.bf16.mxu0 0
  %746 = vmatpush1.bf16.msra.mxu0 0
  %747 = vmatprep.subr.bf16.mxu0 0
  %748 = vmatpush1.bf16.msra.mxu0 0
  %749 = vmatprep.subr.bf16.mxu0 0
  %750 = vmatpush1.bf16.msra.mxu0 0
  %751 = vmatprep.subr.bf16.mxu0 0
  %752 = vmatpush1.bf16.msra.mxu0 0
  %753 = vmatprep.subr.bf16.mxu0 0
  %754 = vmatpush1.bf16.msra.mxu0 0
  %755 = vmatprep.subr.bf16.mxu0 0
  %756 = vmatpush1.bf16.msra.mxu0 0
  %757 = vmatprep.mubr.bf16.mxu0 0
  %758 = vmatmul.mubr.bf16.gmra.mrb[0].mxu0 %v723
  %v759 = vpop.f32.mrb[0].mxu0
  %v760 = vadd.f32 0.0, %v759
  %v761 = vpop.f32.mrb[0].mxu0
  %v762 = vpop.f32.mrb[0].mxu0
  %v763 = vadd.f32 0.0, %v762
  %v764 = vpop.f32.mrb[0].mxu0
  %765 = vdwg.mxu0
  %v766 = vadd.f32 %v24, %v760
  %v767 = vadd.f32 %v25, %v763
  %v768 = vld [vmem:[%s2 + $0x1] sm:$0x1]
  %v769 = vmul.f32 %v766, %v766
  %v770 = vmul.f32 %v767, %v767
  %v771 = vsel %vm104, %v769, 0.0
  %772 = vadd.xlane.f32.xlu0 %v771
  %v773 = vpop.xlane.xlu0 %772
  %v774 = vsel %vm104, %v770, 0.0
  %775 = vadd.xlane.f32.xlu0 %v774
  %v776 = vpop.xlane.xlu0 %775
  %v777 = vmul.f32 %v773, %v111
  %v778 = vmul.f32 %v776, %v111
  %v779 = vadd.f32 %v777, 1e-06
  %v780 = vadd.f32 %v778, 1e-06
  %v781 = vrsqrt.pop %v779
  %v782 = vrsqrt.pop %v780
  %v783 = vmul.f32 %v766, %v781
  %v784 = vmul.f32 %v767, %v782
  %v785 = vlaneseq
  %v786 = vshrl.u32 %v785, 7
  %v787 = vsub.s32 0, %v786
  %v788 = vrot.slane %v768, %v787
  %v789 = vmul.f32 %v783, %v788
  %v790 = vmul.f32 %v784, %v788
  %v791 = vpack.c.bf16 %v790, %v789
  %v796 = vunpack.c.l.b16 %v82
  %v797 = vunpack.c.l.b16 %v84
  %v798 = vunpack.c.l.b16 %v86
  %v799 = vunpack.c.l.b16 %v88
  %v800 = vpack.c.b16 %v797, %v796
  %v801 = vpack.c.b16 %v799, %v798
  %802 = vrot.lane.b32.xlu0 %v140, 96
  %v803 = vpop.permute.xlu0 %802
  %804 = vrot.lane.b32.xlu0 %v800, 96
  %v805 = vpop.permute.xlu0 %804
  %806 = vrot.lane.b32.xlu0 %v142, 96
  %v807 = vpop.permute.xlu0 %806
  %808 = vrot.lane.b32.xlu0 %v801, 96
  %v809 = vpop.permute.xlu0 %808
  %vm810 = vcmask 785408
  %v811 = vsel %vm810, %v803, %v805
  %v812 = vsel %vm810, %v807, %v809
  %v816 = vsel %vm104, %v791, 0
  %818 = vmatprep.subr.bf16.mxu0 0
  %819 = vmatpush1.bf16.msra.mxu0 %v811
  %820 = vmatprep.subr.bf16.mxu0 0
  %821 = vmatpush1.bf16.msra.mxu0 %v812
  %822 = vmatprep.subr.bf16.mxu0 0
  %823 = vmatpush1.bf16.msra.mxu0 0
  %824 = vmatprep.subr.bf16.mxu0 0
  %825 = vmatpush1.bf16.msra.mxu0 0
  %826 = vmatprep.subr.bf16.mxu0 0
  %827 = vmatpush1.bf16.msra.mxu0 0
  %828 = vmatprep.subr.bf16.mxu0 0
  %829 = vmatpush1.bf16.msra.mxu0 0
  %830 = vmatprep.subr.bf16.mxu0 0
  %831 = vmatpush1.bf16.msra.mxu0 0
  %832 = vmatprep.subr.bf16.mxu0 0
  %833 = vmatpush1.bf16.msra.mxu0 0
  %834 = vmatprep.subr.bf16.mxu0 0
  %835 = vmatpush1.bf16.msra.mxu0 0
  %836 = vmatprep.subr.bf16.mxu0 0
  %837 = vmatpush1.bf16.msra.mxu0 0
  %838 = vmatprep.subr.bf16.mxu0 0
  %839 = vmatpush1.bf16.msra.mxu0 0
  %840 = vmatprep.subr.bf16.mxu0 0
  %841 = vmatpush1.bf16.msra.mxu0 0
  %842 = vmatprep.subr.bf16.mxu0 0
  %843 = vmatpush1.bf16.msra.mxu0 0
  %844 = vmatprep.subr.bf16.mxu0 0
  %845 = vmatpush1.bf16.msra.mxu0 0
  %846 = vmatprep.subr.bf16.mxu0 0
  %847 = vmatpush1.bf16.msra.mxu0 0
  %848 = vmatprep.subr.bf16.mxu0 0
  %849 = vmatpush1.bf16.msra.mxu0 0
  %850 = vmatprep.mubr.bf16.mxu0 0
  %851 = vmatmul.mubr.bf16.gmra.mrb[0].mxu0 %v816
  %v852 = vpop.f32.mrb[0].mxu0
  %v853 = vadd.f32 0.0, %v852
  %v854 = vpop.f32.mrb[0].mxu0
  %v855 = vpop.f32.mrb[0].mxu0
  %v856 = vadd.f32 0.0, %v855
  %v857 = vpop.f32.mrb[0].mxu0
  %858 = vdwg.mxu0
  %v859 = vxor.u32 %v853, 2147483648
  %v860 = vxor.u32 %v856, 2147483648
  %v861 = vmul.f32 %v859, 1.442695
  %v862 = vpow.pop %v861
  %v863 = vmul.f32 %v860, 1.442695
  %v864 = vpow.pop %v863
  %v865 = vadd.f32 %v862, 1.0
  %v866 = vadd.f32 %v864, 1.0
  %v867 = vrcp.pop %v865
  %v868 = vmul.f32 1.0, %v867
  %v869 = vrcp.pop %v866
  %v870 = vmul.f32 1.0, %v869
  %v871 = vmul.f32 %v853, %v868
  %v872 = vmul.f32 %v856, %v870
  %875 = vrot.lane.b32.xlu0 %v853, 64
  %v876 = vpop.permute.xlu0 %875
  %877 = vrot.lane.b32.xlu0 %v856, 64
  %v878 = vpop.permute.xlu0 %877
  %v881 = vmul.f32 %v871, %v876
  %v882 = vmul.f32 %v872, %v878
  %v883 = vpack.c.bf16 %v882, %v881
  %v892 = vunpack.c.l.b16 %v93
  %v893 = vunpack.c.l.b16 %v94
  %v894 = vunpack.c.l.b16 %v95
  %v895 = vunpack.c.l.b16 %v96
  %v896 = vunpack.c.l.b16 %v97
  %v897 = vunpack.c.l.b16 %v98
  %v898 = vunpack.c.l.b16 %v99
  %v899 = vunpack.c.l.b16 %v100
  %v900 = vpack.c.b16 %v893, %v892
  %v901 = vpack.c.b16 %v895, %v894
  %v902 = vpack.c.b16 %v897, %v896
  %v903 = vpack.c.b16 %v899, %v898
  %v909 = vsel %vm479, %v883, 0
  %911 = vmatprep.subr.bf16.mxu0 0
  %912 = vmatpush1.bf16.msra.mxu0 %v900
  %913 = vmatprep.subr.bf16.mxu0 0
  %914 = vmatpush1.bf16.msra.mxu0 %v901
  %915 = vmatprep.subr.bf16.mxu0 0
  %916 = vmatpush1.bf16.msra.mxu0 %v902
  %917 = vmatprep.subr.bf16.mxu0 0
  %918 = vmatpush1.bf16.msra.mxu0 %v903
  %919 = vmatprep.subr.bf16.mxu0 0
  %920 = vmatpush1.bf16.msra.mxu0 0
  %921 = vmatprep.subr.bf16.mxu0 0
  %922 = vmatpush1.bf16.msra.mxu0 0
  %923 = vmatprep.subr.bf16.mxu0 0
  %924 = vmatpush1.bf16.msra.mxu0 0
  %925 = vmatprep.subr.bf16.mxu0 0
  %926 = vmatpush1.bf16.msra.mxu0 0
  %927 = vmatprep.subr.bf16.mxu0 0
  %928 = vmatpush1.bf16.msra.mxu0 0
  %929 = vmatprep.subr.bf16.mxu0 0
  %930 = vmatpush1.bf16.msra.mxu0 0
  %931 = vmatprep.subr.bf16.mxu0 0
  %932 = vmatpush1.bf16.msra.mxu0 0
  %933 = vmatprep.subr.bf16.mxu0 0
  %934 = vmatpush1.bf16.msra.mxu0 0
  %935 = vmatprep.subr.bf16.mxu0 0
  %936 = vmatpush1.bf16.msra.mxu0 0
  %937 = vmatprep.subr.bf16.mxu0 0
  %938 = vmatpush1.bf16.msra.mxu0 0
  %939 = vmatprep.subr.bf16.mxu0 0
  %940 = vmatpush1.bf16.msra.mxu0 0
  %941 = vmatprep.subr.bf16.mxu0 0
  %942 = vmatpush1.bf16.msra.mxu0 0
  %943 = vmatprep.mubr.bf16.mxu0 0
  %944 = vmatmul.mubr.bf16.gmra.mrb[0].mxu0 %v909
  %v945 = vpop.f32.mrb[0].mxu0
  %v946 = vadd.f32 0.0, %v945
  %v947 = vpop.f32.mrb[0].mxu0
  %v948 = vpop.f32.mrb[0].mxu0
  %v949 = vadd.f32 0.0, %v948
  %v950 = vpop.f32.mrb[0].mxu0
  %951 = vdwg.mxu0
  %v952 = vadd.f32 %v766, %v946
  %v953 = vadd.f32 %v767, %v949
  %s954 = scalar_lea.vmem %s3, 48
  %v955 = vld [vmem:[%s954] sm:$0xff]
  %v956 = vld [vmem:[%s954 + $0x8] sm:$0xf]
  %v957 = vld [vmem:[%s954 + $0xc] sm:$0xff]
  %v958 = vld [vmem:[%s954 + $0x14] sm:$0xf]
  %v959 = vld [vmem:[%s954 + $0x18] sm:$0xff]
  %v960 = vld [vmem:[%s954 + $0x20] sm:$0xf]
  %v961 = vld [vmem:[%s954 + $0x24] sm:$0xff]
  %v962 = vld [vmem:[%s954 + $0x2c] sm:$0xf]
  %s963 = scalar_lea.vmem %s4, 48
  %v964 = vld [vmem:[%s963] sm:$0xf]
  %v965 = vld [vmem:[%s963 + $0x4] sm:$0xf]
  %v966 = vld [vmem:[%s963 + $0x8] sm:$0xf]
  %v967 = vld [vmem:[%s963 + $0xc] sm:$0xf]
  %v968 = vld [vmem:[%s963 + $0x10] sm:$0xf]
  %v969 = vld [vmem:[%s963 + $0x14] sm:$0xf]
  %v970 = vld [vmem:[%s963 + $0x18] sm:$0xf]
  %v971 = vld [vmem:[%s963 + $0x1c] sm:$0xf]
  %v972 = vld [vmem:[%s963 + $0x20] sm:$0xf]
  %v973 = vld [vmem:[%s963 + $0x24] sm:$0xf]
  %v974 = vld [vmem:[%s963 + $0x28] sm:$0xf]
  %v975 = vld [vmem:[%s963 + $0x2c] sm:$0xf]
  %v976 = vld [vmem:[%s2 + $0x2] sm:$0x1]
  %v977 = vmul.f32 %v952, %v952
  %v978 = vmul.f32 %v953, %v953
  %v979 = vsel %vm104, %v977, 0.0
  %980 = vadd.xlane.f32.xlu0 %v979
  %v981 = vpop.xlane.xlu0 %980
  %v982 = vsel %vm104, %v978, 0.0
  %983 = vadd.xlane.f32.xlu0 %v982
  %v984 = vpop.xlane.xlu0 %983
  %v985 = vmul.f32 %v981, %v111
  %v986 = vmul.f32 %v984, %v111
  %v987 = vadd.f32 %v985, 1e-06
  %v988 = vadd.f32 %v986, 1e-06
  %v989 = vrsqrt.pop %v987
  %v990 = vrsqrt.pop %v988
  %v991 = vmul.f32 %v952, %v989
  %v992 = vmul.f32 %v953, %v990
  %v993 = vlaneseq
  %v994 = vshrl.u32 %v993, 7
  %v995 = vsub.s32 0, %v994
  %v996 = vrot.slane %v976, %v995
  %v997 = vmul.f32 %v991, %v996
  %v998 = vmul.f32 %v992, %v996
  %v999 = vpack.c.bf16 %v998, %v997
  %v1004 = vunpack.c.l.b16 %v955
  %v1005 = vunpack.c.h.b16 %v955
  %v1006 = vunpack.c.l.b16 %v957
  %v1007 = vunpack.c.h.b16 %v957
  %v1008 = vunpack.c.l.b16 %v959
  %v1009 = vunpack.c.h.b16 %v959
  %v1010 = vunpack.c.l.b16 %v961
  %v1011 = vunpack.c.h.b16 %v961
  %v1012 = vpack.c.b16 %v1006, %v1004
  %v1013 = vpack.c.b16 %v1007, %v1005
  %v1014 = vpack.c.b16 %v1010, %v1008
  %v1015 = vpack.c.b16 %v1011, %v1009
  %v1021 = vsel %vm104, %v999, 0
  %1023 = vmatprep.subr.bf16.mxu0 %v1013
  %1024 = vmatpush1.bf16.msra.mxu0 %v1012
  %1025 = vmatprep.subr.bf16.mxu0 %v1015
  %1026 = vmatpush1.bf16.msra.mxu0 %v1014
  %1027 = vmatprep.subr.bf16.mxu0 0
  %1028 = vmatpush1.bf16.msra.mxu0 0
  %1029 = vmatprep.subr.bf16.mxu0 0
  %1030 = vmatpush1.bf16.msra.mxu0 0
  %1031 = vmatprep.subr.bf16.mxu0 0
  %1032 = vmatpush1.bf16.msra.mxu0 0
  %1033 = vmatprep.subr.bf16.mxu0 0
  %1034 = vmatpush1.bf16.msra.mxu0 0
  %1035 = vmatprep.subr.bf16.mxu0 0
  %1036 = vmatpush1.bf16.msra.mxu0 0
  %1037 = vmatprep.subr.bf16.mxu0 0
  %1038 = vmatpush1.bf16.msra.mxu0 0
  %1039 = vmatprep.subr.bf16.mxu0 0
  %1040 = vmatpush1.bf16.msra.mxu0 0
  %1041 = vmatprep.subr.bf16.mxu0 0
  %1042 = vmatpush1.bf16.msra.mxu0 0
  %1043 = vmatprep.subr.bf16.mxu0 0
  %1044 = vmatpush1.bf16.msra.mxu0 0
  %1045 = vmatprep.subr.bf16.mxu0 0
  %1046 = vmatpush1.bf16.msra.mxu0 0
  %1047 = vmatprep.subr.bf16.mxu0 0
  %1048 = vmatpush1.bf16.msra.mxu0 0
  %1049 = vmatprep.subr.bf16.mxu0 0
  %1050 = vmatpush1.bf16.msra.mxu0 0
  %1051 = vmatprep.subr.bf16.mxu0 0
  %1052 = vmatpush1.bf16.msra.mxu0 0
  %1053 = vmatprep.subr.bf16.mxu0 0
  %1054 = vmatpush1.bf16.msra.mxu0 0
  %1055 = vmatprep.mubr.bf16.mxu0 0
  %1056 = vmatmul.mubr.bf16.gmra.mrb[0].mxu0 %v1021
  %v1057 = vpop.f32.mrb[0].mxu0
  %v1058 = vadd.f32 0.0, %v1057
  %v1059 = vpop.f32.mrb[0].mxu0
  %v1060 = vadd.f32 0.0, %v1059
  %v1061 = vpop.f32.mrb[0].mxu0
  %v1062 = vadd.f32 0.0, %v1061
  %v1063 = vpop.f32.mrb[0].mxu0
  %v1064 = vadd.f32 0.0, %v1063
  %1065 = vdwg.mxu0
  %1068 = vrot.lane.b32.xlu0 %v1058, 88
  %v1069 = vpop.permute.xlu0 %1068
  %1070 = vrot.lane.b32.xlu0 %v1062, 88
  %v1071 = vpop.permute.xlu0 %1070
  %1074 = vrot.lane.b32.xlu0 %v1058, 48
  %v1075 = vpop.permute.xlu0 %1074
  %1076 = vrot.lane.b32.xlu0 %v1062, 48
  %v1077 = vpop.permute.xlu0 %1076
  %1082 = vrot.lane.b32.xlu0 %v1058, 8
  %v1083 = vpop.permute.xlu0 %1082
  %1084 = vrot.lane.b32.xlu0 %v1060, 8
  %v1085 = vpop.permute.xlu0 %1084
  %1086 = vrot.lane.b32.xlu0 %v1062, 8
  %v1087 = vpop.permute.xlu0 %1086
  %1088 = vrot.lane.b32.xlu0 %v1064, 8
  %v1089 = vpop.permute.xlu0 %1088
  %v1090 = vsel %vm217, %v1083, %v1085
  %v1091 = vsel %vm217, %v1087, %v1089
  %v1094 = vmul.f32 %v1058, %v26
  %v1095 = vmul.f32 %v1062, %v27
  %v1096 = vmul.f32 %v1069, %v26
  %v1097 = vmul.f32 %v1071, %v27
  %v1098 = vmul.f32 %v1075, %v26
  %v1099 = vmul.f32 %v1077, %v27
  %v1100 = vmul.f32 %v1090, %v26
  %v1101 = vmul.f32 %v1091, %v27
  %v1102 = vmul.f32 %v1058, %v233
  %v1103 = vmul.f32 %v1062, %v235
  %v1104 = vmul.f32 %v1069, %v233
  %v1105 = vmul.f32 %v1071, %v235
  %v1106 = vmul.f32 %v1075, %v233
  %v1107 = vmul.f32 %v1077, %v235
  %v1108 = vmul.f32 %v1090, %v233
  %v1109 = vmul.f32 %v1091, %v235
  %1118 = vrot.lane.b32.xlu0 %v1102, 104
  %v1119 = vpop.permute.xlu0 %1118
  %1120 = vrot.lane.b32.xlu0 %v1103, 104
  %v1121 = vpop.permute.xlu0 %1120
  %1122 = vrot.lane.b32.xlu0 %v1104, 104
  %v1123 = vpop.permute.xlu0 %1122
  %1124 = vrot.lane.b32.xlu0 %v1105, 104
  %v1125 = vpop.permute.xlu0 %1124
  %1126 = vrot.lane.b32.xlu0 %v1106, 104
  %v1127 = vpop.permute.xlu0 %1126
  %1128 = vrot.lane.b32.xlu0 %v1107, 104
  %v1129 = vpop.permute.xlu0 %1128
  %1130 = vrot.lane.b32.xlu0 %v1108, 104
  %v1131 = vpop.permute.xlu0 %1130
  %1132 = vrot.lane.b32.xlu0 %v1109, 104
  %v1133 = vpop.permute.xlu0 %1132
  %v1142 = vadd.f32 %v1094, %v1119
  %v1143 = vadd.f32 %v1095, %v1121
  %v1144 = vadd.f32 %v1096, %v1123
  %v1145 = vadd.f32 %v1097, %v1125
  %v1146 = vadd.f32 %v1098, %v1127
  %v1147 = vadd.f32 %v1099, %v1129
  %v1148 = vadd.f32 %v1100, %v1131
  %v1149 = vadd.f32 %v1101, %v1133
  %v1150 = vmul.f32 %v1058, %v287
  %v1151 = vmul.f32 %v1062, %v289
  %v1152 = vmul.f32 %v1069, %v287
  %v1153 = vmul.f32 %v1071, %v289
  %v1154 = vmul.f32 %v1075, %v287
  %v1155 = vmul.f32 %v1077, %v289
  %v1156 = vmul.f32 %v1090, %v287
  %v1157 = vmul.f32 %v1091, %v289
  %v1158 = vmul.f32 %v1058, %v301
  %v1159 = vmul.f32 %v1062, %v303
  %v1160 = vmul.f32 %v1069, %v301
  %v1161 = vmul.f32 %v1071, %v303
  %v1162 = vmul.f32 %v1075, %v301
  %v1163 = vmul.f32 %v1077, %v303
  %v1164 = vmul.f32 %v1090, %v301
  %v1165 = vmul.f32 %v1091, %v303
  %1174 = vrot.lane.b32.xlu0 %v1158, 104
  %v1175 = vpop.permute.xlu0 %1174
  %1176 = vrot.lane.b32.xlu0 %v1159, 104
  %v1177 = vpop.permute.xlu0 %1176
  %1178 = vrot.lane.b32.xlu0 %v1160, 104
  %v1179 = vpop.permute.xlu0 %1178
  %1180 = vrot.lane.b32.xlu0 %v1161, 104
  %v1181 = vpop.permute.xlu0 %1180
  %1182 = vrot.lane.b32.xlu0 %v1162, 104
  %v1183 = vpop.permute.xlu0 %1182
  %1184 = vrot.lane.b32.xlu0 %v1163, 104
  %v1185 = vpop.permute.xlu0 %1184
  %1186 = vrot.lane.b32.xlu0 %v1164, 104
  %v1187 = vpop.permute.xlu0 %1186
  %1188 = vrot.lane.b32.xlu0 %v1165, 104
  %v1189 = vpop.permute.xlu0 %1188
  %v1198 = vadd.f32 %v1150, %v1175
  %v1199 = vadd.f32 %v1151, %v1177
  %v1200 = vadd.f32 %v1152, %v1179
  %v1201 = vadd.f32 %v1153, %v1181
  %v1202 = vadd.f32 %v1154, %v1183
  %v1203 = vadd.f32 %v1155, %v1185
  %v1204 = vadd.f32 %v1156, %v1187
  %v1205 = vadd.f32 %v1157, %v1189
  %v1206 = vpack.c.bf16 %v1143, %v1142
  %v1207 = vpack.c.bf16 %v1145, %v1144
  %v1208 = vpack.c.bf16 %v1147, %v1146
  %v1209 = vpack.c.bf16 %v1149, %v1148
  %v1210 = vpack.c.bf16 %v1199, %v1198
  %v1211 = vpack.c.bf16 %v1201, %v1200
  %v1212 = vpack.c.bf16 %v1203, %v1202
  %v1213 = vpack.c.bf16 %v1205, %v1204
  %1218 = vrot.lane.b32.xlu0 %v1210, 120
  %v1219 = vpop.permute.xlu0 %1218
  %1220 = vrot.lane.b32.xlu0 %v1211, 120
  %v1221 = vpop.permute.xlu0 %1220
  %1222 = vrot.lane.b32.xlu0 %v1212, 120
  %v1223 = vpop.permute.xlu0 %1222
  %1224 = vrot.lane.b32.xlu0 %v1213, 120
  %v1225 = vpop.permute.xlu0 %1224
  %v1227 = vsel %vm217, %v1206, 0
  %v1230 = vsel %vm217, %v1207, 0
  %v1233 = vsel %vm217, %v1208, 0
  %v1236 = vsel %vm217, %v1209, 0
  %v1239 = vsel %vm217, %v1219, 0
  %v1242 = vsel %vm217, %v1221, 0
  %v1245 = vsel %vm217, %v1223, 0
  %v1248 = vsel %vm217, %v1225, 0
  %1250 = vmatprep.subr.bf16.mxu0 0
  %1251 = vmatpush1.bf16.xpose.msra.mxu0 %v1239
  %1252 = vmatprep.subr.bf16.mxu0 0
  %1253 = vmatpush1.bf16.xpose.msra.mxu0 %v1242
  %1254 = vmatprep.subr.bf16.mxu0 0
  %1255 = vmatpush1.bf16.xpose.msra.mxu0 %v1245
  %1256 = vmatprep.subr.bf16.mxu0 0
  %1257 = vmatpush1.bf16.xpose.msra.mxu0 %v1248
  %1258 = vmatprep.subr.bf16.mxu0 0
  %1259 = vmatpush1.bf16.xpose.msra.mxu0 0
  %1260 = vmatprep.subr.bf16.mxu0 0
  %1261 = vmatpush1.bf16.xpose.msra.mxu0 0
  %1262 = vmatprep.subr.bf16.mxu0 0
  %1263 = vmatpush1.bf16.xpose.msra.mxu0 0
  %1264 = vmatprep.subr.bf16.mxu0 0
  %1265 = vmatpush1.bf16.xpose.msra.mxu0 0
  %1266 = vmatprep.subr.bf16.mxu0 0
  %1267 = vmatpush1.bf16.xpose.msra.mxu0 0
  %1268 = vmatprep.subr.bf16.mxu0 0
  %1269 = vmatpush1.bf16.xpose.msra.mxu0 0
  %1270 = vmatprep.subr.bf16.mxu0 0
  %1271 = vmatpush1.bf16.xpose.msra.mxu0 0
  %1272 = vmatprep.subr.bf16.mxu0 0
  %1273 = vmatpush1.bf16.xpose.msra.mxu0 0
  %1274 = vmatprep.subr.bf16.mxu0 0
  %1275 = vmatpush1.bf16.xpose.msra.mxu0 0
  %1276 = vmatprep.subr.bf16.mxu0 0
  %1277 = vmatpush1.bf16.xpose.msra.mxu0 0
  %1278 = vmatprep.subr.bf16.mxu0 0
  %1279 = vmatpush1.bf16.xpose.msra.mxu0 0
  %1280 = vmatprep.subr.bf16.mxu0 0
  %1281 = vmatpush1.bf16.xpose.msra.mxu0 0
  %1282 = vmatprep.mubr.bf16.mxu0 0
  %1283 = vmatmul.mubr.bf16.gmra.mrb[0].mxu0 %v1227
  %v1284 = vpop.f32.mrb[0].mxu0
  %v1285 = vadd.f32 0.0, %v1284
  %v1286 = vpop.f32.mrb[0].mxu0
  %v1287 = vpop.f32.mrb[0].mxu0
  %v1288 = vadd.f32 0.0, %v1287
  %v1289 = vpop.f32.mrb[0].mxu0
  %1290 = vmatprep.mubr.bf16.mxu0 0
  %1291 = vmatmul.mubr.bf16.gmra.mrb[0].mxu0 %v1230
  %v1292 = vpop.f32.mrb[0].mxu0
  %v1293 = vadd.f32 0.0, %v1292
  %v1294 = vpop.f32.mrb[0].mxu0
  %v1295 = vpop.f32.mrb[0].mxu0
  %v1296 = vadd.f32 0.0, %v1295
  %v1297 = vpop.f32.mrb[0].mxu0
  %1298 = vmatprep.mubr.bf16.mxu0 0
  %1299 = vmatmul.mubr.bf16.gmra.mrb[0].mxu0 %v1233
  %v1300 = vpop.f32.mrb[0].mxu0
  %v1301 = vadd.f32 0.0, %v1300
  %v1302 = vpop.f32.mrb[0].mxu0
  %v1303 = vpop.f32.mrb[0].mxu0
  %v1304 = vadd.f32 0.0, %v1303
  %v1305 = vpop.f32.mrb[0].mxu0
  %1306 = vmatprep.mubr.bf16.mxu0 0
  %1307 = vmatmul.mubr.bf16.gmra.mrb[0].mxu0 %v1236
  %v1308 = vpop.f32.mrb[0].mxu0
  %v1309 = vadd.f32 0.0, %v1308
  %v1310 = vpop.f32.mrb[0].mxu0
  %v1311 = vpop.f32.mrb[0].mxu0
  %v1312 = vadd.f32 0.0, %v1311
  %v1313 = vpop.f32.mrb[0].mxu0
  %1314 = vdwg.mxu0
  %v1315 = vmul.f32 %v1285, 0.35355338
  %v1316 = vmul.f32 %v1288, 0.35355338
  %v1317 = vmul.f32 %v1293, 0.35355338
  %v1318 = vmul.f32 %v1296, 0.35355338
  %v1319 = vmul.f32 %v1301, 0.35355338
  %v1320 = vmul.f32 %v1304, 0.35355338
  %v1321 = vmul.f32 %v1309, 0.35355338
  %v1322 = vmul.f32 %v1312, 0.35355338
  %v1323 = vsel %vm73, %v1315, -1e+30
  %v1324 = vsel %vm74, %v1316, -1e+30
  %v1325 = vsel %vm75, %v1317, -1e+30
  %v1326 = vsel %vm76, %v1318, -1e+30
  %v1327 = vsel %vm77, %v1319, -1e+30
  %v1328 = vsel %vm78, %v1320, -1e+30
  %v1329 = vsel %vm79, %v1321, -1e+30
  %v1330 = vsel %vm80, %v1322, -1e+30
  %v1331 = vsel %vm479, %v1323, -inf
  %1332 = vmax.xlane.f32.xlu0 %v1331
  %v1333 = vpop.xlane.xlu0 %1332
  %v1334 = vsel %vm479, %v1324, -inf
  %1335 = vmax.xlane.f32.xlu0 %v1334
  %v1336 = vpop.xlane.xlu0 %1335
  %v1337 = vsel %vm479, %v1325, -inf
  %1338 = vmax.xlane.f32.xlu0 %v1337
  %v1339 = vpop.xlane.xlu0 %1338
  %v1340 = vsel %vm479, %v1326, -inf
  %1341 = vmax.xlane.f32.xlu0 %v1340
  %v1342 = vpop.xlane.xlu0 %1341
  %v1343 = vsel %vm479, %v1327, -inf
  %1344 = vmax.xlane.f32.xlu0 %v1343
  %v1345 = vpop.xlane.xlu0 %1344
  %v1346 = vsel %vm479, %v1328, -inf
  %1347 = vmax.xlane.f32.xlu0 %v1346
  %v1348 = vpop.xlane.xlu0 %1347
  %v1349 = vsel %vm479, %v1329, -inf
  %1350 = vmax.xlane.f32.xlu0 %v1349
  %v1351 = vpop.xlane.xlu0 %1350
  %v1352 = vsel %vm479, %v1330, -inf
  %1353 = vmax.xlane.f32.xlu0 %v1352
  %v1354 = vpop.xlane.xlu0 %1353
  %v1355 = vsub.f32 %v1323, %v1333
  %v1356 = vsub.f32 %v1324, %v1336
  %v1357 = vsub.f32 %v1325, %v1339
  %v1358 = vsub.f32 %v1326, %v1342
  %v1359 = vsub.f32 %v1327, %v1345
  %v1360 = vsub.f32 %v1328, %v1348
  %v1361 = vsub.f32 %v1329, %v1351
  %v1362 = vsub.f32 %v1330, %v1354
  %v1363 = vmul.f32 %v1355, 1.442695
  %v1364 = vpow.pop %v1363
  %v1365 = vmul.f32 %v1356, 1.442695
  %v1366 = vpow.pop %v1365
  %v1367 = vmul.f32 %v1357, 1.442695
  %v1368 = vpow.pop %v1367
  %v1369 = vmul.f32 %v1358, 1.442695
  %v1370 = vpow.pop %v1369
  %v1371 = vmul.f32 %v1359, 1.442695
  %v1372 = vpow.pop %v1371
  %v1373 = vmul.f32 %v1360, 1.442695
  %v1374 = vpow.pop %v1373
  %v1375 = vmul.f32 %v1361, 1.442695
  %v1376 = vpow.pop %v1375
  %v1377 = vmul.f32 %v1362, 1.442695
  %v1378 = vpow.pop %v1377
  %v1379 = vsel %vm479, %v1364, 0.0
  %1380 = vadd.xlane.f32.xlu0 %v1379
  %v1381 = vpop.xlane.xlu0 %1380
  %v1382 = vsel %vm479, %v1366, 0.0
  %1383 = vadd.xlane.f32.xlu0 %v1382
  %v1384 = vpop.xlane.xlu0 %1383
  %v1385 = vsel %vm479, %v1368, 0.0
  %1386 = vadd.xlane.f32.xlu0 %v1385
  %v1387 = vpop.xlane.xlu0 %1386
  %v1388 = vsel %vm479, %v1370, 0.0
  %1389 = vadd.xlane.f32.xlu0 %v1388
  %v1390 = vpop.xlane.xlu0 %1389
  %v1391 = vsel %vm479, %v1372, 0.0
  %1392 = vadd.xlane.f32.xlu0 %v1391
  %v1393 = vpop.xlane.xlu0 %1392
  %v1394 = vsel %vm479, %v1374, 0.0
  %1395 = vadd.xlane.f32.xlu0 %v1394
  %v1396 = vpop.xlane.xlu0 %1395
  %v1397 = vsel %vm479, %v1376, 0.0
  %1398 = vadd.xlane.f32.xlu0 %v1397
  %v1399 = vpop.xlane.xlu0 %1398
  %v1400 = vsel %vm479, %v1378, 0.0
  %1401 = vadd.xlane.f32.xlu0 %v1400
  %v1402 = vpop.xlane.xlu0 %1401
  %v1403 = vpack.c.bf16 %v1366, %v1364
  %v1404 = vpack.c.bf16 %v1370, %v1368
  %v1405 = vpack.c.bf16 %v1374, %v1372
  %v1406 = vpack.c.bf16 %v1378, %v1376
  %v1407 = vpack.c.bf16 %v1062, %v1058
  %v1408 = vpack.c.bf16 %v1071, %v1069
  %v1409 = vpack.c.bf16 %v1077, %v1075
  %v1410 = vpack.c.bf16 %v1091, %v1090
  %1415 = vrot.lane.b32.xlu0 %v1407, 112
  %v1416 = vpop.permute.xlu0 %1415
  %1417 = vrot.lane.b32.xlu0 %v1408, 112
  %v1418 = vpop.permute.xlu0 %1417
  %1419 = vrot.lane.b32.xlu0 %v1409, 112
  %v1420 = vpop.permute.xlu0 %1419
  %1421 = vrot.lane.b32.xlu0 %v1410, 112
  %v1422 = vpop.permute.xlu0 %1421
  %v1428 = vsel %vm479, %v1403, 0
  %v1431 = vsel %vm479, %v1404, 0
  %v1434 = vsel %vm479, %v1405, 0
  %v1437 = vsel %vm479, %v1406, 0
  %1439 = vmatprep.subr.bf16.mxu0 0
  %1440 = vmatpush1.bf16.msra.mxu0 %v1416
  %1441 = vmatprep.subr.bf16.mxu0 0
  %1442 = vmatpush1.bf16.msra.mxu0 %v1418
  %1443 = vmatprep.subr.bf16.mxu0 0
  %1444 = vmatpush1.bf16.msra.mxu0 %v1420
  %1445 = vmatprep.subr.bf16.mxu0 0
  %1446 = vmatpush1.bf16.msra.mxu0 %v1422
  %1447 = vmatprep.subr.bf16.mxu0 0
  %1448 = vmatpush1.bf16.msra.mxu0 0
  %1449 = vmatprep.subr.bf16.mxu0 0
  %1450 = vmatpush1.bf16.msra.mxu0 0
  %1451 = vmatprep.subr.bf16.mxu0 0
  %1452 = vmatpush1.bf16.msra.mxu0 0
  %1453 = vmatprep.subr.bf16.mxu0 0
  %1454 = vmatpush1.bf16.msra.mxu0 0
  %1455 = vmatprep.subr.bf16.mxu0 0
  %1456 = vmatpush1.bf16.msra.mxu0 0
  %1457 = vmatprep.subr.bf16.mxu0 0
  %1458 = vmatpush1.bf16.msra.mxu0 0
  %1459 = vmatprep.subr.bf16.mxu0 0
  %1460 = vmatpush1.bf16.msra.mxu0 0
  %1461 = vmatprep.subr.bf16.mxu0 0
  %1462 = vmatpush1.bf16.msra.mxu0 0
  %1463 = vmatprep.subr.bf16.mxu0 0
  %1464 = vmatpush1.bf16.msra.mxu0 0
  %1465 = vmatprep.subr.bf16.mxu0 0
  %1466 = vmatpush1.bf16.msra.mxu0 0
  %1467 = vmatprep.subr.bf16.mxu0 0
  %1468 = vmatpush1.bf16.msra.mxu0 0
  %1469 = vmatprep.subr.bf16.mxu0 0
  %1470 = vmatpush1.bf16.msra.mxu0 0
  %1471 = vmatprep.mubr.bf16.mxu0 0
  %1472 = vmatmul.mubr.bf16.gmra.mrb[0].mxu0 %v1428
  %v1473 = vpop.f32.mrb[0].mxu0
  %v1474 = vadd.f32 0.0, %v1473
  %v1475 = vpop.f32.mrb[0].mxu0
  %v1476 = vpop.f32.mrb[0].mxu0
  %v1477 = vadd.f32 0.0, %v1476
  %v1478 = vpop.f32.mrb[0].mxu0
  %1479 = vmatprep.mubr.bf16.mxu0 0
  %1480 = vmatmul.mubr.bf16.gmra.mrb[0].mxu0 %v1431
  %v1481 = vpop.f32.mrb[0].mxu0
  %v1482 = vadd.f32 0.0, %v1481
  %v1483 = vpop.f32.mrb[0].mxu0
  %v1484 = vpop.f32.mrb[0].mxu0
  %v1485 = vadd.f32 0.0, %v1484
  %v1486 = vpop.f32.mrb[0].mxu0
  %1487 = vmatprep.mubr.bf16.mxu0 0
  %1488 = vmatmul.mubr.bf16.gmra.mrb[0].mxu0 %v1434
  %v1489 = vpop.f32.mrb[0].mxu0
  %v1490 = vadd.f32 0.0, %v1489
  %v1491 = vpop.f32.mrb[0].mxu0
  %v1492 = vpop.f32.mrb[0].mxu0
  %v1493 = vadd.f32 0.0, %v1492
  %v1494 = vpop.f32.mrb[0].mxu0
  %1495 = vmatprep.mubr.bf16.mxu0 0
  %1496 = vmatmul.mubr.bf16.gmra.mrb[0].mxu0 %v1437
  %v1497 = vpop.f32.mrb[0].mxu0
  %v1498 = vadd.f32 0.0, %v1497
  %v1499 = vpop.f32.mrb[0].mxu0
  %v1500 = vpop.f32.mrb[0].mxu0
  %v1501 = vadd.f32 0.0, %v1500
  %v1502 = vpop.f32.mrb[0].mxu0
  %1503 = vdwg.mxu0
  %v1504 = vrcp.pop %v1381
  %v1505 = vmul.f32 1.0, %v1504
  %v1506 = vrcp.pop %v1384
  %v1507 = vmul.f32 1.0, %v1506
  %v1508 = vrcp.pop %v1387
  %v1509 = vmul.f32 1.0, %v1508
  %v1510 = vrcp.pop %v1390
  %v1511 = vmul.f32 1.0, %v1510
  %v1512 = vrcp.pop %v1393
  %v1513 = vmul.f32 1.0, %v1512
  %v1514 = vrcp.pop %v1396
  %v1515 = vmul.f32 1.0, %v1514
  %v1516 = vrcp.pop %v1399
  %v1517 = vmul.f32 1.0, %v1516
  %v1518 = vrcp.pop %v1402
  %v1519 = vmul.f32 1.0, %v1518
  %v1520 = vmul.f32 %v1474, %v1505
  %v1521 = vmul.f32 %v1477, %v1507
  %v1522 = vmul.f32 %v1482, %v1509
  %v1523 = vmul.f32 %v1485, %v1511
  %v1524 = vmul.f32 %v1490, %v1513
  %v1525 = vmul.f32 %v1493, %v1515
  %v1526 = vmul.f32 %v1498, %v1517
  %v1527 = vmul.f32 %v1501, %v1519
  %1530 = vrot.lane.b32.xlu0 %v1522, 8
  %v1531 = vpop.permute.xlu0 %1530
  %1532 = vrot.lane.b32.xlu0 %v1523, 8
  %v1533 = vpop.permute.xlu0 %1532
  %1538 = vrot.lane.b32.xlu0 %v1524, 16
  %v1539 = vpop.permute.xlu0 %1538
  %1540 = vrot.lane.b32.xlu0 %v1525, 16
  %v1541 = vpop.permute.xlu0 %1540
  %1546 = vrot.lane.b32.xlu0 %v1526, 24
  %v1547 = vpop.permute.xlu0 %1546
  %1548 = vrot.lane.b32.xlu0 %v1527, 24
  %v1549 = vpop.permute.xlu0 %1548
  %v1552 = vsel %vm217, %v1520, %v1531
  %v1553 = vsel %vm217, %v1521, %v1533
  %v1554 = vsel %vm703, %v1552, %v1539
  %v1555 = vsel %vm703, %v1553, %v1541
  %v1556 = vsel %vm706, %v1554, %v1547
  %v1557 = vsel %vm706, %v1555, %v1549
  %v1558 = vpack.c.bf16 %v1557, %v1556
  %v1563 = vunpack.c.l.b16 %v964
  %v1564 = vunpack.c.l.b16 %v965
  %v1565 = vunpack.c.l.b16 %v966
  %v1566 = vunpack.c.l.b16 %v967
  %v1567 = vpack.c.b16 %v1564, %v1563
  %v1568 = vpack.c.b16 %v1566, %v1565
  %v1572 = vsel %vm104, %v1558, 0
  %1574 = vmatprep.subr.bf16.mxu0 0
  %1575 = vmatpush1.bf16.msra.mxu0 %v1567
  %1576 = vmatprep.subr.bf16.mxu0 0
  %1577 = vmatpush1.bf16.msra.mxu0 %v1568
  %1578 = vmatprep.subr.bf16.mxu0 0
  %1579 = vmatpush1.bf16.msra.mxu0 0
  %1580 = vmatprep.subr.bf16.mxu0 0
  %1581 = vmatpush1.bf16.msra.mxu0 0
  %1582 = vmatprep.subr.bf16.mxu0 0
  %1583 = vmatpush1.bf16.msra.mxu0 0
  %1584 = vmatprep.subr.bf16.mxu0 0
  %1585 = vmatpush1.bf16.msra.mxu0 0
  %1586 = vmatprep.subr.bf16.mxu0 0
  %1587 = vmatpush1.bf16.msra.mxu0 0
  %1588 = vmatprep.subr.bf16.mxu0 0
  %1589 = vmatpush1.bf16.msra.mxu0 0
  %1590 = vmatprep.subr.bf16.mxu0 0
  %1591 = vmatpush1.bf16.msra.mxu0 0
  %1592 = vmatprep.subr.bf16.mxu0 0
  %1593 = vmatpush1.bf16.msra.mxu0 0
  %1594 = vmatprep.subr.bf16.mxu0 0
  %1595 = vmatpush1.bf16.msra.mxu0 0
  %1596 = vmatprep.subr.bf16.mxu0 0
  %1597 = vmatpush1.bf16.msra.mxu0 0
  %1598 = vmatprep.subr.bf16.mxu0 0
  %1599 = vmatpush1.bf16.msra.mxu0 0
  %1600 = vmatprep.subr.bf16.mxu0 0
  %1601 = vmatpush1.bf16.msra.mxu0 0
  %1602 = vmatprep.subr.bf16.mxu0 0
  %1603 = vmatpush1.bf16.msra.mxu0 0
  %1604 = vmatprep.subr.bf16.mxu0 0
  %1605 = vmatpush1.bf16.msra.mxu0 0
  %1606 = vmatprep.mubr.bf16.mxu0 0
  %1607 = vmatmul.mubr.bf16.gmra.mrb[0].mxu0 %v1572
  %v1608 = vpop.f32.mrb[0].mxu0
  %v1609 = vadd.f32 0.0, %v1608
  %v1610 = vpop.f32.mrb[0].mxu0
  %v1611 = vpop.f32.mrb[0].mxu0
  %v1612 = vadd.f32 0.0, %v1611
  %v1613 = vpop.f32.mrb[0].mxu0
  %1614 = vdwg.mxu0
  %v1615 = vadd.f32 %v952, %v1609
  %v1616 = vadd.f32 %v953, %v1612
  %v1617 = vld [vmem:[%s2 + $0x3] sm:$0x1]
  %v1618 = vmul.f32 %v1615, %v1615
  %v1619 = vmul.f32 %v1616, %v1616
  %v1620 = vsel %vm104, %v1618, 0.0
  %1621 = vadd.xlane.f32.xlu0 %v1620
  %v1622 = vpop.xlane.xlu0 %1621
  %v1623 = vsel %vm104, %v1619, 0.0
  %1624 = vadd.xlane.f32.xlu0 %v1623
  %v1625 = vpop.xlane.xlu0 %1624
  %v1626 = vmul.f32 %v1622, %v111
  %v1627 = vmul.f32 %v1625, %v111
  %v1628 = vadd.f32 %v1626, 1e-06
  %v1629 = vadd.f32 %v1627, 1e-06
  %v1630 = vrsqrt.pop %v1628
  %v1631 = vrsqrt.pop %v1629
  %v1632 = vmul.f32 %v1615, %v1630
  %v1633 = vmul.f32 %v1616, %v1631
  %v1634 = vlaneseq
  %v1635 = vshrl.u32 %v1634, 7
  %v1636 = vsub.s32 0, %v1635
  %v1637 = vrot.slane %v1617, %v1636
  %v1638 = vmul.f32 %v1632, %v1637
  %v1639 = vmul.f32 %v1633, %v1637
  %v1640 = vpack.c.bf16 %v1639, %v1638
  %v1645 = vunpack.c.l.b16 %v956
  %v1646 = vunpack.c.l.b16 %v958
  %v1647 = vunpack.c.l.b16 %v960
  %v1648 = vunpack.c.l.b16 %v962
  %v1649 = vpack.c.b16 %v1646, %v1645
  %v1650 = vpack.c.b16 %v1648, %v1647
  %1651 = vrot.lane.b32.xlu0 %v1013, 96
  %v1652 = vpop.permute.xlu0 %1651
  %1653 = vrot.lane.b32.xlu0 %v1649, 96
  %v1654 = vpop.permute.xlu0 %1653
  %1655 = vrot.lane.b32.xlu0 %v1015, 96
  %v1656 = vpop.permute.xlu0 %1655
  %1657 = vrot.lane.b32.xlu0 %v1650, 96
  %v1658 = vpop.permute.xlu0 %1657
  %v1659 = vsel %vm810, %v1652, %v1654
  %v1660 = vsel %vm810, %v1656, %v1658
  %v1664 = vsel %vm104, %v1640, 0
  %1666 = vmatprep.subr.bf16.mxu0 0
  %1667 = vmatpush1.bf16.msra.mxu0 %v1659
  %1668 = vmatprep.subr.bf16.mxu0 0
  %1669 = vmatpush1.bf16.msra.mxu0 %v1660
  %1670 = vmatprep.subr.bf16.mxu0 0
  %1671 = vmatpush1.bf16.msra.mxu0 0
  %1672 = vmatprep.subr.bf16.mxu0 0
  %1673 = vmatpush1.bf16.msra.mxu0 0
  %1674 = vmatprep.subr.bf16.mxu0 0
  %1675 = vmatpush1.bf16.msra.mxu0 0
  %1676 = vmatprep.subr.bf16.mxu0 0
  %1677 = vmatpush1.bf16.msra.mxu0 0
  %1678 = vmatprep.subr.bf16.mxu0 0
  %1679 = vmatpush1.bf16.msra.mxu0 0
  %1680 = vmatprep.subr.bf16.mxu0 0
  %1681 = vmatpush1.bf16.msra.mxu0 0
  %1682 = vmatprep.subr.bf16.mxu0 0
  %1683 = vmatpush1.bf16.msra.mxu0 0
  %1684 = vmatprep.subr.bf16.mxu0 0
  %1685 = vmatpush1.bf16.msra.mxu0 0
  %1686 = vmatprep.subr.bf16.mxu0 0
  %1687 = vmatpush1.bf16.msra.mxu0 0
  %1688 = vmatprep.subr.bf16.mxu0 0
  %1689 = vmatpush1.bf16.msra.mxu0 0
  %1690 = vmatprep.subr.bf16.mxu0 0
  %1691 = vmatpush1.bf16.msra.mxu0 0
  %1692 = vmatprep.subr.bf16.mxu0 0
  %1693 = vmatpush1.bf16.msra.mxu0 0
  %1694 = vmatprep.subr.bf16.mxu0 0
  %1695 = vmatpush1.bf16.msra.mxu0 0
  %1696 = vmatprep.subr.bf16.mxu0 0
  %1697 = vmatpush1.bf16.msra.mxu0 0
  %1698 = vmatprep.mubr.bf16.mxu0 0
  %1699 = vmatmul.mubr.bf16.gmra.mrb[0].mxu0 %v1664
  %v1700 = vpop.f32.mrb[0].mxu0
  %v1701 = vadd.f32 0.0, %v1700
  %v1702 = vpop.f32.mrb[0].mxu0
  %v1703 = vpop.f32.mrb[0].mxu0
  %v1704 = vadd.f32 0.0, %v1703
  %v1705 = vpop.f32.mrb[0].mxu0
  %1706 = vdwg.mxu0
  %v1707 = vxor.u32 %v1701, 2147483648
  %v1708 = vxor.u32 %v1704, 2147483648
  %v1709 = vmul.f32 %v1707, 1.442695
  %v1710 = vpow.pop %v1709
  %v1711 = vmul.f32 %v1708, 1.442695
  %v1712 = vpow.pop %v1711
  %v1713 = vadd.f32 %v1710, 1.0
  %v1714 = vadd.f32 %v1712, 1.0
  %v1715 = vrcp.pop %v1713
  %v1716 = vmul.f32 1.0, %v1715
  %v1717 = vrcp.pop %v1714
  %v1718 = vmul.f32 1.0, %v1717
  %v1719 = vmul.f32 %v1701, %v1716
  %v1720 = vmul.f32 %v1704, %v1718
  %1723 = vrot.lane.b32.xlu0 %v1701, 64
  %v1724 = vpop.permute.xlu0 %1723
  %1725 = vrot.lane.b32.xlu0 %v1704, 64
  %v1726 = vpop.permute.xlu0 %1725
  %v1729 = vmul.f32 %v1719, %v1724
  %v1730 = vmul.f32 %v1720, %v1726
  %v1731 = vpack.c.bf16 %v1730, %v1729
  %v1740 = vunpack.c.l.b16 %v968
  %v1741 = vunpack.c.l.b16 %v969
  %v1742 = vunpack.c.l.b16 %v970
  %v1743 = vunpack.c.l.b16 %v971
  %v1744 = vunpack.c.l.b16 %v972
  %v1745 = vunpack.c.l.b16 %v973
  %v1746 = vunpack.c.l.b16 %v974
  %v1747 = vunpack.c.l.b16 %v975
  %v1748 = vpack.c.b16 %v1741, %v1740
  %v1749 = vpack.c.b16 %v1743, %v1742
  %v1750 = vpack.c.b16 %v1745, %v1744
  %v1751 = vpack.c.b16 %v1747, %v1746
  %v1757 = vsel %vm479, %v1731, 0
  %1759 = vmatprep.subr.bf16.mxu0 0
  %1760 = vmatpush1.bf16.msra.mxu0 %v1748
  %1761 = vmatprep.subr.bf16.mxu0 0
  %1762 = vmatpush1.bf16.msra.mxu0 %v1749
  %1763 = vmatprep.subr.bf16.mxu0 0
  %1764 = vmatpush1.bf16.msra.mxu0 %v1750
  %1765 = vmatprep.subr.bf16.mxu0 0
  %1766 = vmatpush1.bf16.msra.mxu0 %v1751
  %1767 = vmatprep.subr.bf16.mxu0 0
  %1768 = vmatpush1.bf16.msra.mxu0 0
  %1769 = vmatprep.subr.bf16.mxu0 0
  %1770 = vmatpush1.bf16.msra.mxu0 0
  %1771 = vmatprep.subr.bf16.mxu0 0
  %1772 = vmatpush1.bf16.msra.mxu0 0
  %1773 = vmatprep.subr.bf16.mxu0 0
  %1774 = vmatpush1.bf16.msra.mxu0 0
  %1775 = vmatprep.subr.bf16.mxu0 0
  %1776 = vmatpush1.bf16.msra.mxu0 0
  %1777 = vmatprep.subr.bf16.mxu0 0
  %1778 = vmatpush1.bf16.msra.mxu0 0
  %1779 = vmatprep.subr.bf16.mxu0 0
  %1780 = vmatpush1.bf16.msra.mxu0 0
  %1781 = vmatprep.subr.bf16.mxu0 0
  %1782 = vmatpush1.bf16.msra.mxu0 0
  %1783 = vmatprep.subr.bf16.mxu0 0
  %1784 = vmatpush1.bf16.msra.mxu0 0
  %1785 = vmatprep.subr.bf16.mxu0 0
  %1786 = vmatpush1.bf16.msra.mxu0 0
  %1787 = vmatprep.subr.bf16.mxu0 0
  %1788 = vmatpush1.bf16.msra.mxu0 0
  %1789 = vmatprep.subr.bf16.mxu0 0
  %1790 = vmatpush1.bf16.msra.mxu0 0
  %1791 = vmatprep.mubr.bf16.mxu0 0
  %1792 = vmatmul.mubr.bf16.gmra.mrb[0].mxu0 %v1757
  %v1793 = vpop.f32.mrb[0].mxu0
  %v1794 = vadd.f32 0.0, %v1793
  %v1795 = vpop.f32.mrb[0].mxu0
  %v1796 = vpop.f32.mrb[0].mxu0
  %v1797 = vadd.f32 0.0, %v1796
  %v1798 = vpop.f32.mrb[0].mxu0
  %1799 = vdwg.mxu0
  %v1800 = vadd.f32 %v1615, %v1794
  %v1801 = vadd.f32 %v1616, %v1797
  %v1803 = vrot.slane %v1800, 7
  %v1806 = vrot.slane %v1801, 6
  %vm1808 = vcmask 1040384
  %v1809 = vsel %vm1808, %v1803, %v1806
  %v1810 = vld [vmem:[%s2 + $0x4] sm:$0x1]
  %v1811 = vmul.f32 %v1809, %v1809
  %vm1812 = vcmask 254976
  %v1813 = vsel %vm1812, %v1811, 0.0
  %1814 = vadd.xlane.f32.xlu0 %v1813
  %v1815 = vpop.xlane.xlu0 %1814
  %v1816 = vmul.f32 %v1815, %v111
  %v1817 = vadd.f32 %v1816, 1e-06
  %v1818 = vrsqrt.pop %v1817
  %v1819 = vmul.f32 %v1809, %v1818
  %v1820 = vlaneseq
  %v1821 = vshrl.u32 %v1820, 7
  %v1822 = vsub.s32 0, %v1821
  %v1823 = vrot.slane %v1810, %v1822
  %v1824 = vmul.f32 %v1819, %v1823
  %v1825 = vpack.c.bf16 %v1824, %v1824
  %v1826 = vld [vmem:[%s5] sm:$0xf]
  %v1827 = vld [vmem:[%s5 + $0x4] sm:$0xf]
  %v1828 = vld [vmem:[%s5 + $0x8] sm:$0xf]
  %v1829 = vld [vmem:[%s5 + $0xc] sm:$0xf]
  %v1834 = vunpack.c.l.b16 %v1826
  %v1835 = vunpack.c.l.b16 %v1827
  %v1836 = vunpack.c.l.b16 %v1828
  %v1837 = vunpack.c.l.b16 %v1829
  %v1838 = vpack.c.b16 %v1835, %v1834
  %v1839 = vpack.c.b16 %v1837, %v1836
  %v1843 = vsel %vm104, %v1825, 0
  %1845 = vmatprep.subr.bf16.mxu0 0
  %1846 = vmatpush1.bf16.msra.mxu0 %v1838
  %1847 = vmatprep.subr.bf16.mxu0 0
  %1848 = vmatpush1.bf16.msra.mxu0 %v1839
  %1849 = vmatprep.subr.bf16.mxu0 0
  %1850 = vmatpush1.bf16.msra.mxu0 0
  %1851 = vmatprep.subr.bf16.mxu0 0
  %1852 = vmatpush1.bf16.msra.mxu0 0
  %1853 = vmatprep.subr.bf16.mxu0 0
  %1854 = vmatpush1.bf16.msra.mxu0 0
  %1855 = vmatprep.subr.bf16.mxu0 0
  %1856 = vmatpush1.bf16.msra.mxu0 0
  %1857 = vmatprep.subr.bf16.mxu0 0
  %1858 = vmatpush1.bf16.msra.mxu0 0
  %1859 = vmatprep.subr.bf16.mxu0 0
  %1860 = vmatpush1.bf16.msra.mxu0 0
  %1861 = vmatprep.subr.bf16.mxu0 0
  %1862 = vmatpush1.bf16.msra.mxu0 0
  %1863 = vmatprep.subr.bf16.mxu0 0
  %1864 = vmatpush1.bf16.msra.mxu0 0
  %1865 = vmatprep.subr.bf16.mxu0 0
  %1866 = vmatpush1.bf16.msra.mxu0 0
  %1867 = vmatprep.subr.bf16.mxu0 0
  %1868 = vmatpush1.bf16.msra.mxu0 0
  %1869 = vmatprep.subr.bf16.mxu0 0
  %1870 = vmatpush1.bf16.msra.mxu0 0
  %1871 = vmatprep.subr.bf16.mxu0 0
  %1872 = vmatpush1.bf16.msra.mxu0 0
  %1873 = vmatprep.subr.bf16.mxu0 0
  %1874 = vmatpush1.bf16.msra.mxu0 0
  %1875 = vmatprep.subr.bf16.mxu0 0
  %1876 = vmatpush1.bf16.msra.mxu0 0
  %1877 = vmatprep.mubr.bf16.mxu0 0
  %1878 = vmatmul.mubr.bf16.gmra.mrb[0].mxu0 %v1843
  %v1879 = vpop.f32.mrb[0].mxu0
  %v1880 = vadd.f32 0.0, %v1879
  %v1881 = vpop.f32.mrb[0].mxu0
  %v1882 = vpop.f32.mrb[0].mxu0
  %v1883 = vpop.f32.mrb[0].mxu0
  %1884 = vdwg.mxu0
  %1885 = vst [vmem:[%s6] sm:$0x3] %v1880
  // Predicated region
  $region26: #{llm_forward.1} parent=0 // pred_check
    _
  $region27: #{llm_forward.1} parent=0 // pred_check_branch
    %1887 = sbr.rel (0) target = $region29
  $region28: #{llm_forward.1} parent=0 // pred_region
    _
  $region29: #{llm_forward.1} parent=0 // pred_fallthru
    _
  // Predicated region
  $region30: #{llm_forward.1} parent=0 // pred_check
    _
  $region31: #{llm_forward.1} parent=0 // pred_check_branch
    %1889 = sbr.rel (0) target = $region33
  $region32: #{llm_forward.1} parent=0 // pred_region
    _
  $region33: #{llm_forward.1} parent=0 // pred_fallthru
    _

</llo_original>
